<compile_context>
chip_gen: v7x
topology: tpu7x:2x2x1
jax: 0.10.0
libtpu: 0.0.40
codegen_flags: <defaults>
</compile_context>

<pallas_src>
import functools

import jax
import jax.numpy as jnp
from jax import lax
from jax.experimental import pallas as pl
from jax.experimental.pallas import tpu as pltpu


def _round_up(x, m):
    return ((x + m - 1) // m) * m


def _pad_axis_to(x, axis, target):
    pad = target - x.shape[axis]
    if pad <= 0:
        return x
    widths = [(0, 0)] * x.ndim
    widths[axis] = (0, pad)
    return jnp.pad(x, widths)


def lstm_kernel(gx_ref, whh_ref, out_ref, h_out_ref, c_out_ref,
                h_scr, c_scr, *, t_total):
    """One time-tile of the LSTM recurrence.

    gx_ref  : (Tt, Bp, 4*Hp) f32   precomputed x @ W_ih^T + b_ih + b_hh (padded)
    whh_ref : (Hp, 4*Hp)     bf16  W_hh^T (padded, gate-blocked)
    out_ref : (Tt, Bp, Hp)   f32   per-step hidden outputs for this tile
    h_out_ref, c_out_ref : (Bp, Hp) f32 final hidden / cell state
    h_scr, c_scr         : (Bp, Hp) f32 VMEM scratch carrying h/c across tiles
    """
    tile = pl.program_id(0)
    n_tiles = pl.num_programs(0)
    t_tile = gx_ref.shape[0]
    Hp = whh_ref.shape[0]
    need_mask = (t_total % t_tile) != 0  # static

    @pl.when(tile == 0)
    def _init():
        h_scr[...] = jnp.zeros_like(h_scr)
        c_scr[...] = jnp.zeros_like(c_scr)

    def step(t, carry):
        h, c = carry
        # Only the h-dependent matmul lives on the serial critical path.
        # bf16 operands -> native MXU rate; f32 accumulate.
        gates = gx_ref[t] + jnp.dot(h.astype(jnp.bfloat16), whh_ref[...],
                                    preferred_element_type=jnp.float32)
        # Hp is a multiple of 128 -> each slice is a full-vreg lane-aligned cut.
        i_g = jax.nn.sigmoid(gates[:, 0 * Hp:1 * Hp])
        f_g = jax.nn.sigmoid(gates[:, 1 * Hp:2 * Hp])
        g_g = jnp.tanh(gates[:, 2 * Hp:3 * Hp])
        o_g = jax.nn.sigmoid(gates[:, 3 * Hp:4 * Hp])

        c_new = f_g * c + i_g * g_g
        h_new = o_g * jnp.tanh(c_new)

        if need_mask:
            # Keep the carry frozen past the real sequence length (padded T).
            valid = (tile * t_tile + t) < t_total
            h_new = jnp.where(valid, h_new, h)
            c_new = jnp.where(valid, c_new, c)

        out_ref[t] = h_new                      # lane-dense (Bp, Hp) store
        return (h_new, c_new)

    h, c = lax.fori_loop(0, t_tile, step, (h_scr[...], c_scr[...]), unroll=4)
    h_scr[...] = h
    c_scr[...] = c

    @pl.when(tile == n_tiles - 1)
    def _finalize():
        h_out_ref[...] = h
        c_out_ref[...] = c


@functools.partial(jax.jit, static_argnames=("t_tile",))
def word_encoder_forward(input_seq, embedding, w_ih, w_hh, b_ih, b_hh,
                         *, t_tile=4):
    """input_seq: (B, T) int32 tokens.

    Returns (outputs (B,T,H), hidden (1,B,H), cell (1,B,H)) matching
    torch.nn.LSTM(batch_first=True, num_layers=1) on zero initial state.
    """
    B, T = input_seq.shape
    E = embedding.shape[1]
    H = w_hh.shape[1]

    Bp = _round_up(max(B, 8), 8)        # sublane multiple
    Hp = _round_up(max(H, 128), 128)    # lane multiple
    t_tile = min(t_tile, T)
    n_tiles = (T + t_tile - 1) // t_tile
    Tp = n_tiles * t_tile

    # ---- pad the CHEAP things: weights/bias to gate-blocked (4*Hp) layout,
    #      and the tiny int32 token matrix to (Tp, Bp) time-major.
    w_ih_p = _pad_axis_to(w_ih.reshape(4, H, E), 1, Hp).reshape(4 * Hp, E)
    bias_p = _pad_axis_to((b_ih + b_hh).reshape(4, H), 1, Hp).reshape(4 * Hp)

    tokens_tm = _pad_axis_to(jnp.transpose(input_seq), 1, Bp)    # (T, Bp)
    tokens_tm = _pad_axis_to(tokens_tm, 0, Tp)                   # (Tp, Bp)

    # ---- glue in plain JAX: gather + hoisted input projection (one big matmul)
    embedded_tm = embedding[tokens_tm].astype(jnp.float32)       # (Tp, Bp, E)
    gates_x = (embedded_tm.reshape(Tp * Bp, E) @ w_ih_p.T
               + bias_p).reshape(Tp, Bp, 4 * Hp)                 # (Tp, Bp, 4Hp)

    # W_hh^T, gate-blocked, zero-padded (padded hidden units stay inert), bf16
    # so the per-step matmul runs at native MXU rate.
    whh = jnp.transpose(w_hh).reshape(H, 4, H)                   # (H, 4, H)
    whh = _pad_axis_to(_pad_axis_to(whh, 0, Hp), 2, Hp)          # (Hp, 4, Hp)
    whh = whh.reshape(Hp, 4 * Hp).astype(jnp.bfloat16)

    kernel = functools.partial(lstm_kernel, t_total=T)

    outputs_tm, h_last, c_last = pl.pallas_call(
        kernel,
        out_shape=(
            jax.ShapeDtypeStruct((Tp, Bp, Hp), jnp.float32),
            jax.ShapeDtypeStruct((Bp, Hp), jnp.float32),
            jax.ShapeDtypeStruct((Bp, Hp), jnp.float32),
        ),
        grid_spec=pltpu.PrefetchScalarGridSpec(
            num_scalar_prefetch=0,
            grid=(n_tiles,),
            in_specs=[
                pl.BlockSpec((t_tile, Bp, 4 * Hp), lambda i: (i, 0, 0)),
                pl.BlockSpec((Hp, 4 * Hp), lambda i: (0, 0)),
            ],
            out_specs=(
                pl.BlockSpec((t_tile, Bp, Hp), lambda i: (i, 0, 0)),
                pl.BlockSpec((Bp, Hp), lambda i: (0, 0)),
                pl.BlockSpec((Bp, Hp), lambda i: (0, 0)),
            ),
            scratch_shapes=[
                pltpu.VMEM((Bp, Hp), jnp.float32),   # h carry
                pltpu.VMEM((Bp, Hp), jnp.float32),   # c carry
            ],
        ),
        compiler_params=pltpu.CompilerParams(
            dimension_semantics=("arbitrary",)),     # serial time recurrence
    )(gates_x, whh)

    # Un-pad and return batch_first layout.
    outputs = jnp.transpose(outputs_tm[:T, :B, :H], (1, 0, 2))   # (B, T, H)
    hidden = h_last[:B, :H][None, :, :]                          # (1, B, H)
    cell = c_last[:B, :H][None, :, :]                            # (1, B, H)
    return outputs, hidden, cell


def _reference_forward(input_seq, embedding, w_ih, w_hh, b_ih, b_hh):
    """Pure-JAX f32 reference (lax.scan) mirroring torch.nn.LSTM semantics."""
    H = w_hh.shape[1]
    embedded = embedding[input_seq]                  # (B, T, E)
    x_tm = jnp.transpose(embedded, (1, 0, 2))        # (T, B, E)
    B = x_tm.shape[1]

    def step(carry, x_t):
        h, c = carry
        gates = x_t @ w_ih.T + b_ih + h @ w_hh.T + b_hh
        i = jax.nn.sigmoid(gates[:, 0 * H:1 * H])
        f = jax.nn.sigmoid(gates[:, 1 * H:2 * H])
        g = jnp.tanh(gates[:, 2 * H:3 * H])
        o = jax.nn.sigmoid(gates[:, 3 * H:4 * H])
        c_new = f * c + i * g
        h_new = o * jnp.tanh(c_new)
        return (h_new, c_new), h_new

    init = (jnp.zeros((B, H), jnp.float32), jnp.zeros((B, H), jnp.float32))
    (h_last, c_last), outs_tm = jax.lax.scan(step, init, x_tm)
    return jnp.transpose(outs_tm, (1, 0, 2)), h_last[None], c_last[None]


if __name__ == "__main__":
    # Small shapes consistent with the module.
    vocab_size = 50
    embed_size = 16
    hidden_size = 32
    batch = 2
    seq_len = 8

    key = jax.random.PRNGKey(0)
    k_emb, k_wih, k_whh, k_bih, k_bhh, k_tok = jax.random.split(key, 6)

    # Deterministic parameter init (PyTorch-like scales).
    embedding = jax.random.normal(k_emb, (vocab_size, embed_size), jnp.float32)
    bound = 1.0 / jnp.sqrt(hidden_size)
    w_ih = jax.random.uniform(k_wih, (4 * hidden_size, embed_size), jnp.float32,
                              -bound, bound)
    w_hh = jax.random.uniform(k_whh, (4 * hidden_size, hidden_size), jnp.float32,
                              -bound, bound)
    b_ih = jax.random.uniform(k_bih, (4 * hidden_size,), jnp.float32, -bound, bound)
    b_hh = jax.random.uniform(k_bhh, (4 * hidden_size,), jnp.float32, -bound, bound)

    input_seq = jax.random.randint(k_tok, (batch, seq_len), 0, vocab_size,
                                   dtype=jnp.int32)

    outputs, hidden, cell = word_encoder_forward(
        input_seq, embedding, w_ih, w_hh, b_ih, b_hh, t_tile=4)
    jax.block_until_ready((outputs, hidden, cell))

    # Sanity check against a pure-JAX f32 reference (kernel uses bf16 matmul
    # operands for the recurrent projection, so tolerance is loosened).
    ref_out, ref_h, ref_c = _reference_forward(
        input_seq, embedding, w_ih, w_hh, b_ih, b_hh)
    assert outputs.shape == (batch, seq_len, hidden_size)
    assert hidden.shape == (1, batch, hidden_size)
    assert cell.shape == (1, batch, hidden_size)
    assert jnp.allclose(outputs, ref_out, atol=2e-2)
    assert jnp.allclose(hidden, ref_h, atol=2e-2)
    assert jnp.allclose(cell, ref_c, atol=2e-2)

    print("KERNEL_OK")
</pallas_src>

<mosaic_0001>
module attributes {stable_mosaic.version = 11 : i64} {
  func.func @lstm_kernel(%arg0: i32, %arg1: memref<4x8x512xf32, #tpu.memory_space<vmem>>, %arg2: memref<128x512xbf16, #tpu.memory_space<vmem>>, %arg3: memref<4x8x128xf32, #tpu.memory_space<vmem>>, %arg4: memref<8x128xf32, #tpu.memory_space<vmem>>, %arg5: memref<8x128xf32, #tpu.memory_space<vmem>>, %arg6: memref<8x128xf32, #tpu.memory_space<vmem>>, %arg7: memref<8x128xf32, #tpu.memory_space<vmem>>) attributes {dimension_semantics = [#tpu.dimension_semantics<arbitrary>], iteration_bounds = array<i64: 2>, scalar_prefetch = 0 : i64, scratch_operands = 2 : i64, tpu.core_type = #tpu.core_type<tc>, window_params = [{transform_indices = @transform_0, window_bounds = array<i64: 4, 8, 512>}, {pipeline_mode = #tpu.pipeline_mode<synchronous>, transform_indices = @transform_1, window_bounds = array<i64: 128, 512>}, {transform_indices = @transform_2, window_bounds = array<i64: 4, 8, 128>}, {pipeline_mode = #tpu.pipeline_mode<synchronous>, transform_indices = @transform_3, window_bounds = array<i64: 8, 128>}, {pipeline_mode = #tpu.pipeline_mode<synchronous>, transform_indices = @transform_4, window_bounds = array<i64: 8, 128>}]} {
    %c0_i32 = arith.constant 0 : i32
    %0 = arith.cmpi eq, %arg0, %c0_i32 : i32
    %1 = arith.extui %0 : i1 to i32
    %c0_i32_0 = arith.constant 0 : i32
    %2 = arith.cmpi ne, %1, %c0_i32_0 : i32
    scf.if %2 {
      %cst_50 = arith.constant 0.000000e+00 : f32
      %154 = vector.broadcast %cst_50 : f32 to vector<8x128xf32>
      %c0_51 = arith.constant 0 : index
      %c0_52 = arith.constant 0 : index
      %155 = vector.load %arg6[%c0_51, %c0_52] : memref<8x128xf32, #tpu.memory_space<vmem>>, vector<8x128xf32>
      tpu.vector_store %arg6[%c0_51, %c0_52], %154 {strides = array<i32>} : memref<8x128xf32, #tpu.memory_space<vmem>>, vector<8x128xf32>,
      %cst_53 = arith.constant 0.000000e+00 : f32
      %156 = vector.broadcast %cst_53 : f32 to vector<8x128xf32>
      %c0_54 = arith.constant 0 : index
      %c0_55 = arith.constant 0 : index
      %157 = vector.load %arg7[%c0_54, %c0_55] : memref<8x128xf32, #tpu.memory_space<vmem>>, vector<8x128xf32>
      tpu.vector_store %arg7[%c0_54, %c0_55], %156 {strides = array<i32>} : memref<8x128xf32, #tpu.memory_space<vmem>>, vector<8x128xf32>,
    } else {
    }
    %c0 = arith.constant 0 : index
    %c0_1 = arith.constant 0 : index
    %3 = vector.load %arg6[%c0, %c0_1] : memref<8x128xf32, #tpu.memory_space<vmem>>, vector<8x128xf32>
    %c0_2 = arith.constant 0 : index
    %c0_3 = arith.constant 0 : index
    %4 = vector.load %arg7[%c0_2, %c0_3] : memref<8x128xf32, #tpu.memory_space<vmem>>, vector<8x128xf32>
    %c0_i32_4 = arith.constant 0 : i32
    %5 = arith.index_cast %c0_i32_4 : i32 to index
    %c0_5 = arith.constant 0 : index
    %c0_6 = arith.constant 0 : index
    %6 = vector.load %arg1[%5, %c0_5, %c0_6] : memref<4x8x512xf32, #tpu.memory_space<vmem>>, vector<1x8x512xf32>
    %7 = vector.shape_cast %6 : vector<1x8x512xf32> to vector<8x512xf32>
    %8 = arith.truncf %3 : vector<8x128xf32> to vector<8x128xbf16>
    %c0_7 = arith.constant 0 : index
    %c0_8 = arith.constant 0 : index
    %9 = vector.load %arg2[%c0_7, %c0_8] : memref<128x512xbf16, #tpu.memory_space<vmem>>, vector<128x512xbf16>
    %cst = arith.constant dense<0.000000e+00> : vector<8x512xf32>
    %10 = tpu.matmul %8, %9, %cst {dimension_numbers = #tpu.dot_dimension_numbers<[1], [0], [0], [1], [0, 0, 1, 1], [], []>} : vector<8x128xbf16>, vector<128x512xbf16>, vector<8x512xf32> -> vector<8x512xf32>
    %11 = arith.addf %7, %10 : vector<8x512xf32>
    %12 = vector.extract_strided_slice %11 {offsets = [0, 0], sizes = [8, 128], strides = [1, 1]} : vector<8x512xf32> to vector<8x128xf32>
    %13 = arith.negf %12 : vector<8x128xf32>
    %14 = math.exp %13 : vector<8x128xf32>
    %cst_9 = arith.constant 1.000000e+00 : f32
    %15 = vector.broadcast %cst_9 : f32 to vector<8x128xf32>
    %16 = arith.addf %15, %14 : vector<8x128xf32>
    %17 = arith.divf %15, %16 : vector<8x128xf32>
    %18 = vector.extract_strided_slice %11 {offsets = [0, 128], sizes = [8, 128], strides = [1, 1]} : vector<8x512xf32> to vector<8x128xf32>
    %19 = arith.negf %18 : vector<8x128xf32>
    %20 = math.exp %19 : vector<8x128xf32>
    %cst_10 = arith.constant 1.000000e+00 : f32
    %21 = vector.broadcast %cst_10 : f32 to vector<8x128xf32>
    %22 = arith.addf %21, %20 : vector<8x128xf32>
    %23 = arith.divf %21, %22 : vector<8x128xf32>
    %24 = vector.extract_strided_slice %11 {offsets = [0, 256], sizes = [8, 128], strides = [1, 1]} : vector<8x512xf32> to vector<8x128xf32>
    %25 = math.tanh %24 : vector<8x128xf32>
    %26 = vector.extract_strided_slice %11 {offsets = [0, 384], sizes = [8, 128], strides = [1, 1]} : vector<8x512xf32> to vector<8x128xf32>
    %27 = arith.negf %26 : vector<8x128xf32>
    %28 = math.exp %27 : vector<8x128xf32>
    %cst_11 = arith.constant 1.000000e+00 : f32
    %29 = vector.broadcast %cst_11 : f32 to vector<8x128xf32>
    %30 = arith.addf %29, %28 : vector<8x128xf32>
    %31 = arith.divf %29, %30 : vector<8x128xf32>
    %32 = arith.mulf %23, %4 : vector<8x128xf32>
    %33 = arith.mulf %17, %25 : vector<8x128xf32>
    %34 = arith.addf %32, %33 : vector<8x128xf32>
    %35 = math.tanh %34 : vector<8x128xf32>
    %36 = arith.mulf %31, %35 : vector<8x128xf32>
    %37 = arith.index_cast %c0_i32_4 : i32 to index
    %c0_12 = arith.constant 0 : index
    %c0_13 = arith.constant 0 : index
    %38 = vector.load %arg3[%37, %c0_12, %c0_13] : memref<4x8x128xf32, #tpu.memory_space<vmem>>, vector<1x8x128xf32>
    %39 = vector.shape_cast %38 : vector<1x8x128xf32> to vector<8x128xf32>
    %40 = vector.shape_cast %36 : vector<8x128xf32> to vector<1x8x128xf32>
    tpu.vector_store %arg3[%37, %c0_12, %c0_13], %40 {strides = array<i32>} : memref<4x8x128xf32, #tpu.memory_space<vmem>>, vector<1x8x128xf32>,
    %c1_i32 = arith.constant 1 : i32
    %41 = arith.index_cast %c1_i32 : i32 to index
    %c0_14 = arith.constant 0 : index
    %c0_15 = arith.constant 0 : index
    %42 = vector.load %arg1[%41, %c0_14, %c0_15] : memref<4x8x512xf32, #tpu.memory_space<vmem>>, vector<1x8x512xf32>
    %43 = vector.shape_cast %42 : vector<1x8x512xf32> to vector<8x512xf32>
    %44 = arith.truncf %36 : vector<8x128xf32> to vector<8x128xbf16>
    %c0_16 = arith.constant 0 : index
    %c0_17 = arith.constant 0 : index
    %45 = vector.load %arg2[%c0_16, %c0_17] : memref<128x512xbf16, #tpu.memory_space<vmem>>, vector<128x512xbf16>
    %cst_18 = arith.constant dense<0.000000e+00> : vector<8x512xf32>
    %46 = tpu.matmul %44, %45, %cst_18 {dimension_numbers = #tpu.dot_dimension_numbers<[1], [0], [0], [1], [0, 0, 1, 1], [], []>} : vector<8x128xbf16>, vector<128x512xbf16>, vector<8x512xf32> -> vector<8x512xf32>
    %47 = arith.addf %43, %46 : vector<8x512xf32>
    %48 = vector.extract_strided_slice %47 {offsets = [0, 0], sizes = [8, 128], strides = [1, 1]} : vector<8x512xf32> to vector<8x128xf32>
    %49 = arith.negf %48 : vector<8x128xf32>
    %50 = math.exp %49 : vector<8x128xf32>
    %cst_19 = arith.constant 1.000000e+00 : f32
    %51 = vector.broadcast %cst_19 : f32 to vector<8x128xf32>
    %52 = arith.addf %51, %50 : vector<8x128xf32>
    %53 = arith.divf %51, %52 : vector<8x128xf32>
    %54 = vector.extract_strided_slice %47 {offsets = [0, 128], sizes = [8, 128], strides = [1, 1]} : vector<8x512xf32> to vector<8x128xf32>
    %55 = arith.negf %54 : vector<8x128xf32>
    %56 = math.exp %55 : vector<8x128xf32>
    %cst_20 = arith.constant 1.000000e+00 : f32
    %57 = vector.broadcast %cst_20 : f32 to vector<8x128xf32>
    %58 = arith.addf %57, %56 : vector<8x128xf32>
    %59 = arith.divf %57, %58 : vector<8x128xf32>
    %60 = vector.extract_strided_slice %47 {offsets = [0, 256], sizes = [8, 128], strides = [1, 1]} : vector<8x512xf32> to vector<8x128xf32>
    %61 = math.tanh %60 : vector<8x128xf32>
    %62 = vector.extract_strided_slice %47 {offsets = [0, 384], sizes = [8, 128], strides = [1, 1]} : vector<8x512xf32> to vector<8x128xf32>
    %63 = arith.negf %62 : vector<8x128xf32>
    %64 = math.exp %63 : vector<8x128xf32>
    %cst_21 = arith.constant 1.000000e+00 : f32
    %65 = vector.broadcast %cst_21 : f32 to vector<8x128xf32>
    %66 = arith.addf %65, %64 : vector<8x128xf32>
    %67 = arith.divf %65, %66 : vector<8x128xf32>
    %68 = arith.mulf %59, %34 : vector<8x128xf32>
    %69 = arith.mulf %53, %61 : vector<8x128xf32>
    %70 = arith.addf %68, %69 : vector<8x128xf32>
    %71 = math.tanh %70 : vector<8x128xf32>
    %72 = arith.mulf %67, %71 : vector<8x128xf32>
    %73 = arith.index_cast %c1_i32 : i32 to index
    %c0_22 = arith.constant 0 : index
    %c0_23 = arith.constant 0 : index
    %74 = vector.load %arg3[%73, %c0_22, %c0_23] : memref<4x8x128xf32, #tpu.memory_space<vmem>>, vector<1x8x128xf32>
    %75 = vector.shape_cast %74 : vector<1x8x128xf32> to vector<8x128xf32>
    %76 = vector.shape_cast %72 : vector<8x128xf32> to vector<1x8x128xf32>
    tpu.vector_store %arg3[%73, %c0_22, %c0_23], %76 {strides = array<i32>} : memref<4x8x128xf32, #tpu.memory_space<vmem>>, vector<1x8x128xf32>,
    %c2_i32 = arith.constant 2 : i32
    %77 = arith.index_cast %c2_i32 : i32 to index
    %c0_24 = arith.constant 0 : index
    %c0_25 = arith.constant 0 : index
    %78 = vector.load %arg1[%77, %c0_24, %c0_25] : memref<4x8x512xf32, #tpu.memory_space<vmem>>, vector<1x8x512xf32>
    %79 = vector.shape_cast %78 : vector<1x8x512xf32> to vector<8x512xf32>
    %80 = arith.truncf %72 : vector<8x128xf32> to vector<8x128xbf16>
    %c0_26 = arith.constant 0 : index
    %c0_27 = arith.constant 0 : index
    %81 = vector.load %arg2[%c0_26, %c0_27] : memref<128x512xbf16, #tpu.memory_space<vmem>>, vector<128x512xbf16>
    %cst_28 = arith.constant dense<0.000000e+00> : vector<8x512xf32>
    %82 = tpu.matmul %80, %81, %cst_28 {dimension_numbers = #tpu.dot_dimension_numbers<[1], [0], [0], [1], [0, 0, 1, 1], [], []>} : vector<8x128xbf16>, vector<128x512xbf16>, vector<8x512xf32> -> vector<8x512xf32>
    %83 = arith.addf %79, %82 : vector<8x512xf32>
    %84 = vector.extract_strided_slice %83 {offsets = [0, 0], sizes = [8, 128], strides = [1, 1]} : vector<8x512xf32> to vector<8x128xf32>
    %85 = arith.negf %84 : vector<8x128xf32>
    %86 = math.exp %85 : vector<8x128xf32>
    %cst_29 = arith.constant 1.000000e+00 : f32
    %87 = vector.broadcast %cst_29 : f32 to vector<8x128xf32>
    %88 = arith.addf %87, %86 : vector<8x128xf32>
    %89 = arith.divf %87, %88 : vector<8x128xf32>
    %90 = vector.extract_strided_slice %83 {offsets = [0, 128], sizes = [8, 128], strides = [1, 1]} : vector<8x512xf32> to vector<8x128xf32>
    %91 = arith.negf %90 : vector<8x128xf32>
    %92 = math.exp %91 : vector<8x128xf32>
    %cst_30 = arith.constant 1.000000e+00 : f32
    %93 = vector.broadcast %cst_30 : f32 to vector<8x128xf32>
    %94 = arith.addf %93, %92 : vector<8x128xf32>
    %95 = arith.divf %93, %94 : vector<8x128xf32>
    %96 = vector.extract_strided_slice %83 {offsets = [0, 256], sizes = [8, 128], strides = [1, 1]} : vector<8x512xf32> to vector<8x128xf32>
    %97 = math.tanh %96 : vector<8x128xf32>
    %98 = vector.extract_strided_slice %83 {offsets = [0, 384], sizes = [8, 128], strides = [1, 1]} : vector<8x512xf32> to vector<8x128xf32>
    %99 = arith.negf %98 : vector<8x128xf32>
    %100 = math.exp %99 : vector<8x128xf32>
    %cst_31 = arith.constant 1.000000e+00 : f32
    %101 = vector.broadcast %cst_31 : f32 to vector<8x128xf32>
    %102 = arith.addf %101, %100 : vector<8x128xf32>
    %103 = arith.divf %101, %102 : vector<8x128xf32>
    %104 = arith.mulf %95, %70 : vector<8x128xf32>
    %105 = arith.mulf %89, %97 : vector<8x128xf32>
    %106 = arith.addf %104, %105 : vector<8x128xf32>
    %107 = math.tanh %106 : vector<8x128xf32>
    %108 = arith.mulf %103, %107 : vector<8x128xf32>
    %109 = arith.index_cast %c2_i32 : i32 to index
    %c0_32 = arith.constant 0 : index
    %c0_33 = arith.constant 0 : index
    %110 = vector.load %arg3[%109, %c0_32, %c0_33] : memref<4x8x128xf32, #tpu.memory_space<vmem>>, vector<1x8x128xf32>
    %111 = vector.shape_cast %110 : vector<1x8x128xf32> to vector<8x128xf32>
    %112 = vector.shape_cast %108 : vector<8x128xf32> to vector<1x8x128xf32>
    tpu.vector_store %arg3[%109, %c0_32, %c0_33], %112 {strides = array<i32>} : memref<4x8x128xf32, #tpu.memory_space<vmem>>, vector<1x8x128xf32>,
    %c3_i32 = arith.constant 3 : i32
    %113 = arith.index_cast %c3_i32 : i32 to index
    %c0_34 = arith.constant 0 : index
    %c0_35 = arith.constant 0 : index
    %114 = vector.load %arg1[%113, %c0_34, %c0_35] : memref<4x8x512xf32, #tpu.memory_space<vmem>>, vector<1x8x512xf32>
    %115 = vector.shape_cast %114 : vector<1x8x512xf32> to vector<8x512xf32>
    %116 = arith.truncf %108 : vector<8x128xf32> to vector<8x128xbf16>
    %c0_36 = arith.constant 0 : index
    %c0_37 = arith.constant 0 : index
    %117 = vector.load %arg2[%c0_36, %c0_37] : memref<128x512xbf16, #tpu.memory_space<vmem>>, vector<128x512xbf16>
    %cst_38 = arith.constant dense<0.000000e+00> : vector<8x512xf32>
    %118 = tpu.matmul %116, %117, %cst_38 {dimension_numbers = #tpu.dot_dimension_numbers<[1], [0], [0], [1], [0, 0, 1, 1], [], []>} : vector<8x128xbf16>, vector<128x512xbf16>, vector<8x512xf32> -> vector<8x512xf32>
    %119 = arith.addf %115, %118 : vector<8x512xf32>
    %120 = vector.extract_strided_slice %119 {offsets = [0, 0], sizes = [8, 128], strides = [1, 1]} : vector<8x512xf32> to vector<8x128xf32>
    %121 = arith.negf %120 : vector<8x128xf32>
    %122 = math.exp %121 : vector<8x128xf32>
    %cst_39 = arith.constant 1.000000e+00 : f32
    %123 = vector.broadcast %cst_39 : f32 to vector<8x128xf32>
    %124 = arith.addf %123, %122 : vector<8x128xf32>
    %125 = arith.divf %123, %124 : vector<8x128xf32>
    %126 = vector.extract_strided_slice %119 {offsets = [0, 128], sizes = [8, 128], strides = [1, 1]} : vector<8x512xf32> to vector<8x128xf32>
    %127 = arith.negf %126 : vector<8x128xf32>
    %128 = math.exp %127 : vector<8x128xf32>
    %cst_40 = arith.constant 1.000000e+00 : f32
    %129 = vector.broadcast %cst_40 : f32 to vector<8x128xf32>
    %130 = arith.addf %129, %128 : vector<8x128xf32>
    %131 = arith.divf %129, %130 : vector<8x128xf32>
    %132 = vector.extract_strided_slice %119 {offsets = [0, 256], sizes = [8, 128], strides = [1, 1]} : vector<8x512xf32> to vector<8x128xf32>
    %133 = math.tanh %132 : vector<8x128xf32>
    %134 = vector.extract_strided_slice %119 {offsets = [0, 384], sizes = [8, 128], strides = [1, 1]} : vector<8x512xf32> to vector<8x128xf32>
    %135 = arith.negf %134 : vector<8x128xf32>
    %136 = math.exp %135 : vector<8x128xf32>
    %cst_41 = arith.constant 1.000000e+00 : f32
    %137 = vector.broadcast %cst_41 : f32 to vector<8x128xf32>
    %138 = arith.addf %137, %136 : vector<8x128xf32>
    %139 = arith.divf %137, %138 : vector<8x128xf32>
    %140 = arith.mulf %131, %106 : vector<8x128xf32>
    %141 = arith.mulf %125, %133 : vector<8x128xf32>
    %142 = arith.addf %140, %141 : vector<8x128xf32>
    %143 = math.tanh %142 : vector<8x128xf32>
    %144 = arith.mulf %139, %143 : vector<8x128xf32>
    %145 = arith.index_cast %c3_i32 : i32 to index
    %c0_42 = arith.constant 0 : index
    %c0_43 = arith.constant 0 : index
    %146 = vector.load %arg3[%145, %c0_42, %c0_43] : memref<4x8x128xf32, #tpu.memory_space<vmem>>, vector<1x8x128xf32>
    %147 = vector.shape_cast %146 : vector<1x8x128xf32> to vector<8x128xf32>
    %148 = vector.shape_cast %144 : vector<8x128xf32> to vector<1x8x128xf32>
    tpu.vector_store %arg3[%145, %c0_42, %c0_43], %148 {strides = array<i32>} : memref<4x8x128xf32, #tpu.memory_space<vmem>>, vector<1x8x128xf32>,
    %c4_i32 = arith.constant 4 : i32
    %c0_44 = arith.constant 0 : index
    %c0_45 = arith.constant 0 : index
    %149 = vector.load %arg6[%c0_44, %c0_45] : memref<8x128xf32, #tpu.memory_space<vmem>>, vector<8x128xf32>
    tpu.vector_store %arg6[%c0_44, %c0_45], %144 {strides = array<i32>} : memref<8x128xf32, #tpu.memory_space<vmem>>, vector<8x128xf32>,
    %c0_46 = arith.constant 0 : index
    %c0_47 = arith.constant 0 : index
    %150 = vector.load %arg7[%c0_46, %c0_47] : memref<8x128xf32, #tpu.memory_space<vmem>>, vector<8x128xf32>
    tpu.vector_store %arg7[%c0_46, %c0_47], %142 {strides = array<i32>} : memref<8x128xf32, #tpu.memory_space<vmem>>, vector<8x128xf32>,
    %c1_i32_48 = arith.constant 1 : i32
    %151 = arith.cmpi eq, %arg0, %c1_i32_48 : i32
    %152 = arith.extui %151 : i1 to i32
    %c0_i32_49 = arith.constant 0 : i32
    %153 = arith.cmpi ne, %152, %c0_i32_49 : i32
    scf.if %153 {
      %c0_50 = arith.constant 0 : index
      %c0_51 = arith.constant 0 : index
      %154 = vector.load %arg4[%c0_50, %c0_51] : memref<8x128xf32, #tpu.memory_space<vmem>>, vector<8x128xf32>
      tpu.vector_store %arg4[%c0_50, %c0_51], %144 {strides = array<i32>} : memref<8x128xf32, #tpu.memory_space<vmem>>, vector<8x128xf32>,
      %c0_52 = arith.constant 0 : index
      %c0_53 = arith.constant 0 : index
      %155 = vector.load %arg5[%c0_52, %c0_53] : memref<8x128xf32, #tpu.memory_space<vmem>>, vector<8x128xf32>
      tpu.vector_store %arg5[%c0_52, %c0_53], %142 {strides = array<i32>} : memref<8x128xf32, #tpu.memory_space<vmem>>, vector<8x128xf32>,
    } else {
    }
    return
  }
  func.func @transform_0(%arg0: i32) -> (i32, i32, i32) {
    %c0_i32 = arith.constant 0 : i32
    %c0_i32_0 = arith.constant 0 : i32
    %c0_i32_1 = arith.constant 0 : i32
    return %arg0, %c0_i32, %c0_i32_0 : i32, i32, i32
  }
  func.func @transform_1(%arg0: i32) -> (i32, i32) {
    %c0_i32 = arith.constant 0 : i32
    %c0_i32_0 = arith.constant 0 : i32
    %c0_i32_1 = arith.constant 0 : i32
    return %c0_i32, %c0_i32_0 : i32, i32
  }
  func.func @transform_2(%arg0: i32) -> (i32, i32, i32) {
    %c0_i32 = arith.constant 0 : i32
    %c0_i32_0 = arith.constant 0 : i32
    %c0_i32_1 = arith.constant 0 : i32
    return %arg0, %c0_i32, %c0_i32_0 : i32, i32, i32
  }
  func.func @transform_3(%arg0: i32) -> (i32, i32) {
    %c0_i32 = arith.constant 0 : i32
    %c0_i32_0 = arith.constant 0 : i32
    %c0_i32_1 = arith.constant 0 : i32
    return %c0_i32, %c0_i32_0 : i32, i32
  }
  func.func @transform_4(%arg0: i32) -> (i32, i32) {
    %c0_i32 = arith.constant 0 : i32
    %c0_i32_0 = arith.constant 0 : i32
    %c0_i32_1 = arith.constant 0 : i32
    return %c0_i32, %c0_i32_0 : i32, i32
  }
}

</mosaic_0001>

<llo_original>
// kernel: word_encoder_forward.1
$region0: #{word_encoder_forward.1}
  #allocation0 [shape = 'u32[]', space=smem, size = 0x4, offset = 0x4, fixed_abs, tag = 'smem constant byte address 0x4 - core index']
  #allocation1 [shape = 'u32[144,128]{1,0:T(1,128)}', space=vmem, size = 0x12000, scoped, tag = 'internal scratch']
  #allocation2 [shape = 'f32[8,128]{1,0:T(8,128)}', space=vmem, size = 0x1000, scoped, tag = 'scratch operand']
  #allocation3 [shape = 'f32[8,128]{1,0:T(8,128)}', space=vmem, size = 0x1000, scoped, tag = 'scratch operand']
  %s0 = inlined_call_operand.vmem [shape: f32[8,8,512], index: 0, kind: input, shape index: {}]
  %s1 = inlined_call_operand.vmem [shape: bf16[128,512], index: 1, kind: input, shape index: {}]
  %s2 = inlined_call_operand.vmem [shape: f32[8,8,128], index: 2, kind: output, shape index: {0}]
  %s3 = inlined_call_operand.vmem [shape: f32[8,128], index: 3, kind: output, shape index: {1}]
  %s4 = inlined_call_operand.vmem [shape: f32[8,128], index: 4, kind: output, shape index: {2}]
  %5 = xla_tuple %s2, %s3, %s4
  %s6 = sld [smem:[#allocation0]]
  $region65: #{word_encoder_forward.1} parent=0
    _
  %s8 = ssub.s32 1, %s6
  %s9 = scalar_select 0, %s8, %s6
  loop: start=0, step=1, limit=4
  $region2: #{word_encoder_forward.1} parent=0 // loop_pre_header
    _
  $region3: #{word_encoder_forward.1} parent=0 // loop_header
    %s11 = sphi 0, %s15
    %p12 = scmp.ge.s32.totalorder %s11, 4
    %s21 = sphi 0, %s23
    %s24 = sphi 0, %s21
    %s25 = sphi 0, %s24
    %s41 = sphi 0, %s25
    %s45 = sphi 0, %s45
    %s47 = sphi 0, %s45
    %s48 = sphi 0, %s47
    %s62 = sphi 0, %s48
    %s68 = sphi 0, %s70
    %s71 = sphi 0, %s68
    %s72 = sphi 0, %s71
    %s88 = sphi 0, %s72
    %s92 = sphi 0, %s92
    %s94 = sphi 0, %s92
    %s95 = sphi 0, %s94
    %s109 = sphi 0, %s95
    %s113 = sphi 0, %s113
    %s115 = sphi 0, %s113
    %s116 = sphi 0, %s115
    %s130 = sphi 0, %s116
  $region4: #{word_encoder_forward.1} parent=0 // loop_header_branch
    %14 = sbr.rel (%p12) target = $region8
  $region5: #{word_encoder_forward.1} parent=0 // loop_body
    %s16 = ssub.s32 %s11, 1
    %s17 = ssub.s32 %s11, 2
    %s18 = sadd.s32 %s11, 1
    %s19 = ssub.s32 %s11, %s18
    %p20 = scmp.eq.s32.totalorder %s19, 0
    %s22 = sadd.s32 %s21, 1
    %s23 = scalar_select %p20, %s21, %s22
    %p26 = pneg %p20
    %p27 = scmp.eq.s32.totalorder %s11, 1
    %p28 = por %p26, %p27
    %p29 = scmp.ne.s32.totalorder %s21, %s24
    %p30 = scmp.eq.s32.totalorder %s11, 0
    %p31 = por %p29, %p30
    %p32 = scmp.ne.s32.totalorder %s21, %s24
    %p33 = scmp.eq.s32.totalorder %s16, 1
    %p34 = por %p32, %p33
    %p35 = scmp.ne.s32.totalorder %s24, %s25
    %p36 = scmp.eq.s32.totalorder %s16, 0
    %p37 = por %p35, %p36
    %p38 = scmp.ne.s32.totalorder %s24, %s25
    %p39 = scmp.eq.s32.totalorder %s17, 1
    %p40 = por %p38, %p39
    %p42 = scmp.ne.s32.totalorder %s25, %s41
    %p43 = scmp.eq.s32.totalorder %s17, 0
    %p44 = por %p42, %p43
    %s46 = sadd.s32 %s45, 1
    %p49 = scmp.eq.s32.totalorder %s11, 1
    %p50 = scmp.ne.s32.totalorder %s45, %s47
    %p51 = scmp.eq.s32.totalorder %s11, 0
    %p52 = por %p50, %p51
    %p53 = scmp.ne.s32.totalorder %s45, %s47
    %p54 = scmp.eq.s32.totalorder %s16, 1
    %p55 = por %p53, %p54
    %p56 = scmp.ne.s32.totalorder %s47, %s48
    %p57 = scmp.eq.s32.totalorder %s16, 0
    %p58 = por %p56, %p57
    %p59 = scmp.ne.s32.totalorder %s47, %s48
    %p60 = scmp.eq.s32.totalorder %s17, 1
    %p61 = por %p59, %p60
    %p63 = scmp.ne.s32.totalorder %s48, %s62
    %p64 = scmp.eq.s32.totalorder %s17, 0
    %p65 = por %p63, %p64
    %s66 = ssub.s32 %s11, %s18
    %p67 = scmp.eq.s32.totalorder %s66, 0
    %s69 = sadd.s32 %s68, 1
    %s70 = scalar_select %p67, %s68, %s69
    %p73 = pneg %p67
    %p74 = scmp.eq.s32.totalorder %s11, 1
    %p75 = por %p73, %p74
    %p76 = scmp.ne.s32.totalorder %s68, %s71
    %p77 = scmp.eq.s32.totalorder %s11, 0
    %p78 = por %p76, %p77
    %p79 = scmp.ne.s32.totalorder %s68, %s71
    %p80 = scmp.eq.s32.totalorder %s16, 1
    %p81 = por %p79, %p80
    %p82 = scmp.ne.s32.totalorder %s71, %s72
    %p83 = scmp.eq.s32.totalorder %s16, 0
    %p84 = por %p82, %p83
    %p85 = scmp.ne.s32.totalorder %s71, %s72
    %p86 = scmp.eq.s32.totalorder %s17, 1
    %p87 = por %p85, %p86
    %p89 = scmp.ne.s32.totalorder %s72, %s88
    %p90 = scmp.eq.s32.totalorder %s17, 0
    %p91 = por %p89, %p90
    %s93 = sadd.s32 %s92, 1
    %p96 = scmp.eq.s32.totalorder %s11, 1
    %p97 = scmp.ne.s32.totalorder %s92, %s94
    %p98 = scmp.eq.s32.totalorder %s11, 0
    %p99 = por %p97, %p98
    %p100 = scmp.ne.s32.totalorder %s92, %s94
    %p101 = scmp.eq.s32.totalorder %s16, 1
    %p102 = por %p100, %p101
    %p103 = scmp.ne.s32.totalorder %s94, %s95
    %p104 = scmp.eq.s32.totalorder %s16, 0
    %p105 = por %p103, %p104
    %p106 = scmp.ne.s32.totalorder %s94, %s95
    %p107 = scmp.eq.s32.totalorder %s17, 1
    %p108 = por %p106, %p107
    %p110 = scmp.ne.s32.totalorder %s95, %s109
    %p111 = scmp.eq.s32.totalorder %s17, 0
    %p112 = por %p110, %p111
    %s114 = sadd.s32 %s113, 1
    %p117 = scmp.eq.s32.totalorder %s11, 1
    %p118 = scmp.ne.s32.totalorder %s113, %s115
    %p119 = scmp.eq.s32.totalorder %s11, 0
    %p120 = por %p118, %p119
    %p121 = scmp.ne.s32.totalorder %s113, %s115
    %p122 = scmp.eq.s32.totalorder %s16, 1
    %p123 = por %p121, %p122
    %p124 = scmp.ne.s32.totalorder %s115, %s116
    %p125 = scmp.eq.s32.totalorder %s16, 0
    %p126 = por %p124, %p125
    %p127 = scmp.ne.s32.totalorder %s115, %s116
    %p128 = scmp.eq.s32.totalorder %s17, 1
    %p129 = por %p127, %p128
    %p131 = scmp.ne.s32.totalorder %s116, %s130
    %p132 = scmp.eq.s32.totalorder %s17, 0
    %p133 = por %p131, %p132
    %p134 = scmp.le.s32.totalorder 1, %s11
    %p135 = scmp.lt.s32.totalorder %s11, 3
    %p136 = pnand %p134, %p135
    %p137 = pneg %p136
    // Predicated region
    $region9: #{word_encoder_forward.1} parent=5 // pred_check
      _
    $region10: #{word_encoder_forward.1} parent=5 // pred_check_branch
      %139 = sbr.rel (%p136) target = $region12
    $region11: #{word_encoder_forward.1} parent=5 // pred_region
      %s140 = ssub.s32 %s11, 1
      // Predicated region
      $region13: #{word_encoder_forward.1} parent=11 // pred_check
        %p141 = pneg %p58
      $region14: #{word_encoder_forward.1} parent=11 // pred_check_branch
        %143 = sbr.rel (%p141) target = $region16
      $region15: #{word_encoder_forward.1} parent=11 // pred_region
        _
      $region16: #{word_encoder_forward.1} parent=11 // pred_fallthru
        _
    $region12: #{word_encoder_forward.1} parent=5 // pred_fallthru
      _
    %p144 = scmp.lt.s32.totalorder %s11, 2
    // Predicated region
    $region17: #{word_encoder_forward.1} parent=5 // pred_check
      %p145 = pneg %p144
    $region18: #{word_encoder_forward.1} parent=5 // pred_check_branch
      %147 = sbr.rel (%p145) target = $region20
    $region19: #{word_encoder_forward.1} parent=5 // pred_region
      // Predicated region
      $region21: #{word_encoder_forward.1} parent=19 // pred_check
        %p148 = pneg %p31
      $region22: #{word_encoder_forward.1} parent=19 // pred_check_branch
        %150 = sbr.rel (%p148) target = $region24
      $region23: #{word_encoder_forward.1} parent=19 // pred_region
        %s151 = smul.u32 4, %s11
        %p152 = scmp.lt.s32.totalorder %s151, 7
        %s153 = scalar_select %p152, %s151, 7
        %s154 = smul.addr %s153, 4
        %s155 = smul.addr %s154, 8
        %s156 = scalar_lea.vmem %s0, %s155
        %s157 = smul.u32 4, %s11
      $region24: #{word_encoder_forward.1} parent=19 // pred_fallthru
        _
    $region20: #{word_encoder_forward.1} parent=5 // pred_fallthru
      _
    %p158 = scmp.le.s32.totalorder 1, %s11
    %p159 = scmp.lt.s32.totalorder %s11, 3
    %p160 = pnand %p158, %p159
    %p161 = pneg %p160
    // Predicated region
    $region25: #{word_encoder_forward.1} parent=5 // pred_check
      _
    $region26: #{word_encoder_forward.1} parent=5 // pred_check_branch
      %163 = sbr.rel (%p160) target = $region28
    $region27: #{word_encoder_forward.1} parent=5 // pred_region
      %s164 = ssub.s32 %s11, 1
      %s165 = smul.u32 4, %s16
      %p166 = scmp.lt.s32.totalorder %s165, 7
      %s167 = scalar_select %p166, %s165, 7
      %s168 = smul.addr %s167, 4
      %s169 = smul.addr %s168, 8
      %s170 = scalar_lea.vmem %s0, %s169
      %p171 = pneg %p37
      %p172 = pneg %p34
      %p173 = pneg %p58
      %p174 = pneg %p55
      %p175 = pneg %p84
      %p176 = pneg %p81
      %s177 = smul.u32 4, %s16
      %p178 = scmp.lt.s32.totalorder %s177, 7
      %s179 = scalar_select %p178, %s177, 7
      %s180 = smul.addr %s179, 8
      %s181 = scalar_lea.vmem %s2, %s180
      %p182 = pneg %p105
      %p183 = pneg %p102
      %p184 = pneg %p126
      %p185 = pneg %p123
      %s186 = smul.u32 4, %s16
      %p187 = scmp.lt.s32.totalorder %s186, 7
      %s188 = scalar_select %p187, %s186, 7
      %s189 = smul.addr %s188, 4
      %s190 = smul.addr %s189, 8
      %s191 = scalar_lea.vmem %s0, %s190
      %s192 = smul.u32 4, %s16
      %s193 = smul.u32 4, %s16
      %p194 = scmp.lt.s32.totalorder %s193, 7
      %s195 = scalar_select %p194, %s193, 7
      %s196 = smul.addr %s195, 8
      %s197 = scalar_lea.vmem %s2, %s196
      %s198 = smul.u32 4, %s16
      %p200 = scmp.eq.s32.totalorder %s16, 0
      // Predicated region
      $region29: #{word_encoder_forward.1} parent=27 // pred_check
        %p201 = pneg %p200
      $region30: #{word_encoder_forward.1} parent=27 // pred_check_branch
        %203 = sbr.rel (%p201) target = $region32
      $region31: #{word_encoder_forward.1} parent=27 // pred_region
        %204 = vst [vmem:[#allocation2] sm:$0xff] 0.0
        %205 = vst [vmem:[#allocation3] sm:$0xff] 0.0
      $region32: #{word_encoder_forward.1} parent=27 // pred_fallthru
        _
      %v206 = vld [vmem:[#allocation2] sm:$0xff]
      %v207 = vld [vmem:[#allocation3] sm:$0xff]
      %v208 = vld [vmem:[%s191] sm:$0xff]
      %v209 = vld [vmem:[%s191 + $0x8] sm:$0xff]
      %v210 = vld [vmem:[%s191 + $0x10] sm:$0xff]
      %v211 = vld [vmem:[%s191 + $0x18] sm:$0xff]
      %v212 = vpack.c.bf16 %v206, %v206
      %v213 = vld [vmem:[%s1] sm:$0xff]
      %v214 = vld [vmem:[%s1 + $0x8] sm:$0xff]
      %v215 = vld [vmem:[%s1 + $0x10] sm:$0xff]
      %v216 = vld [vmem:[%s1 + $0x18] sm:$0xff]
      %v217 = vld [vmem:[%s1 + $0x20] sm:$0xff]
      %v218 = vld [vmem:[%s1 + $0x28] sm:$0xff]
      %v219 = vld [vmem:[%s1 + $0x30] sm:$0xff]
      %v220 = vld [vmem:[%s1 + $0x38] sm:$0xff]
      %v221 = vld [vmem:[%s1 + $0x40] sm:$0xff]
      %v222 = vld [vmem:[%s1 + $0x48] sm:$0xff]
      %v223 = vld [vmem:[%s1 + $0x50] sm:$0xff]
      %v224 = vld [vmem:[%s1 + $0x58] sm:$0xff]
      %v225 = vld [vmem:[%s1 + $0x60] sm:$0xff]
      %v226 = vld [vmem:[%s1 + $0x68] sm:$0xff]
      %v227 = vld [vmem:[%s1 + $0x70] sm:$0xff]
      %v228 = vld [vmem:[%s1 + $0x78] sm:$0xff]
      %v229 = vld [vmem:[%s1 + $0x80] sm:$0xff]
      %v230 = vld [vmem:[%s1 + $0x88] sm:$0xff]
      %v231 = vld [vmem:[%s1 + $0x90] sm:$0xff]
      %v232 = vld [vmem:[%s1 + $0x98] sm:$0xff]
      %v233 = vld [vmem:[%s1 + $0xa0] sm:$0xff]
      %v234 = vld [vmem:[%s1 + $0xa8] sm:$0xff]
      %v235 = vld [vmem:[%s1 + $0xb0] sm:$0xff]
      %v236 = vld [vmem:[%s1 + $0xb8] sm:$0xff]
      %v237 = vld [vmem:[%s1 + $0xc0] sm:$0xff]
      %v238 = vld [vmem:[%s1 + $0xc8] sm:$0xff]
      %v239 = vld [vmem:[%s1 + $0xd0] sm:$0xff]
      %v240 = vld [vmem:[%s1 + $0xd8] sm:$0xff]
      %v241 = vld [vmem:[%s1 + $0xe0] sm:$0xff]
      %v242 = vld [vmem:[%s1 + $0xe8] sm:$0xff]
      %v243 = vld [vmem:[%s1 + $0xf0] sm:$0xff]
      %v244 = vld [vmem:[%s1 + $0xf8] sm:$0xff]
      %v277 = vunpack.c.l.b16 %v213
      %v278 = vunpack.c.h.b16 %v213
      %v279 = vunpack.c.l.b16 %v214
      %v280 = vunpack.c.h.b16 %v214
      %v281 = vunpack.c.l.b16 %v215
      %v282 = vunpack.c.h.b16 %v215
      %v283 = vunpack.c.l.b16 %v216
      %v284 = vunpack.c.h.b16 %v216
      %v285 = vunpack.c.l.b16 %v217
      %v286 = vunpack.c.h.b16 %v217
      %v287 = vunpack.c.l.b16 %v218
      %v288 = vunpack.c.h.b16 %v218
      %v289 = vunpack.c.l.b16 %v219
      %v290 = vunpack.c.h.b16 %v219
      %v291 = vunpack.c.l.b16 %v220
      %v292 = vunpack.c.h.b16 %v220
      %v293 = vunpack.c.l.b16 %v221
      %v294 = vunpack.c.h.b16 %v221
      %v295 = vunpack.c.l.b16 %v222
      %v296 = vunpack.c.h.b16 %v222
      %v297 = vunpack.c.l.b16 %v223
      %v298 = vunpack.c.h.b16 %v223
      %v299 = vunpack.c.l.b16 %v224
      %v300 = vunpack.c.h.b16 %v224
      %v301 = vunpack.c.l.b16 %v225
      %v302 = vunpack.c.h.b16 %v225
      %v303 = vunpack.c.l.b16 %v226
      %v304 = vunpack.c.h.b16 %v226
      %v305 = vunpack.c.l.b16 %v227
      %v306 = vunpack.c.h.b16 %v227
      %v307 = vunpack.c.l.b16 %v228
      %v308 = vunpack.c.h.b16 %v228
      %v309 = vunpack.c.l.b16 %v229
      %v310 = vunpack.c.h.b16 %v229
      %v311 = vunpack.c.l.b16 %v230
      %v312 = vunpack.c.h.b16 %v230
      %v313 = vunpack.c.l.b16 %v231
      %v314 = vunpack.c.h.b16 %v231
      %v315 = vunpack.c.l.b16 %v232
      %v316 = vunpack.c.h.b16 %v232
      %v317 = vunpack.c.l.b16 %v233
      %v318 = vunpack.c.h.b16 %v233
      %v319 = vunpack.c.l.b16 %v234
      %v320 = vunpack.c.h.b16 %v234
      %v321 = vunpack.c.l.b16 %v235
      %v322 = vunpack.c.h.b16 %v235
      %v323 = vunpack.c.l.b16 %v236
      %v324 = vunpack.c.h.b16 %v236
      %v325 = vunpack.c.l.b16 %v237
      %v326 = vunpack.c.h.b16 %v237
      %v327 = vunpack.c.l.b16 %v238
      %v328 = vunpack.c.h.b16 %v238
      %v329 = vunpack.c.l.b16 %v239
      %v330 = vunpack.c.h.b16 %v239
      %v331 = vunpack.c.l.b16 %v240
      %v332 = vunpack.c.h.b16 %v240
      %v333 = vunpack.c.l.b16 %v241
      %v334 = vunpack.c.h.b16 %v241
      %v335 = vunpack.c.l.b16 %v242
      %v336 = vunpack.c.h.b16 %v242
      %v337 = vunpack.c.l.b16 %v243
      %v338 = vunpack.c.h.b16 %v243
      %v339 = vunpack.c.l.b16 %v244
      %v340 = vunpack.c.h.b16 %v244
      %v341 = vpack.c.b16 %v281, %v277
      %v342 = vpack.c.b16 %v282, %v278
      %v343 = vpack.c.b16 %v283, %v279
      %v344 = vpack.c.b16 %v284, %v280
      %v345 = vpack.c.b16 %v289, %v285
      %v346 = vpack.c.b16 %v290, %v286
      %v347 = vpack.c.b16 %v291, %v287
      %v348 = vpack.c.b16 %v292, %v288
      %v349 = vpack.c.b16 %v297, %v293
      %v350 = vpack.c.b16 %v298, %v294
      %v351 = vpack.c.b16 %v299, %v295
      %v352 = vpack.c.b16 %v300, %v296
      %v353 = vpack.c.b16 %v305, %v301
      %v354 = vpack.c.b16 %v306, %v302
      %v355 = vpack.c.b16 %v307, %v303
      %v356 = vpack.c.b16 %v308, %v304
      %v357 = vpack.c.b16 %v313, %v309
      %v358 = vpack.c.b16 %v314, %v310
      %v359 = vpack.c.b16 %v315, %v311
      %v360 = vpack.c.b16 %v316, %v312
      %v361 = vpack.c.b16 %v321, %v317
      %v362 = vpack.c.b16 %v322, %v318
      %v363 = vpack.c.b16 %v323, %v319
      %v364 = vpack.c.b16 %v324, %v320
      %v365 = vpack.c.b16 %v329, %v325
      %v366 = vpack.c.b16 %v330, %v326
      %v367 = vpack.c.b16 %v331, %v327
      %v368 = vpack.c.b16 %v332, %v328
      %v369 = vpack.c.b16 %v337, %v333
      %v370 = vpack.c.b16 %v338, %v334
      %v371 = vpack.c.b16 %v339, %v335
      %v372 = vpack.c.b16 %v340, %v336
      %405 = vmatprep.subr.bf16.mxu0 %v342
      %406 = vmatpush1.bf16.msra.mxu0 %v341
      %407 = vmatprep.subr.bf16.mxu0 %v346
      %408 = vmatpush1.bf16.msra.mxu0 %v345
      %409 = vmatprep.subr.bf16.mxu0 %v350
      %410 = vmatpush1.bf16.msra.mxu0 %v349
      %411 = vmatprep.subr.bf16.mxu0 %v354
      %412 = vmatpush1.bf16.msra.mxu0 %v353
      %413 = vmatprep.subr.bf16.mxu0 %v358
      %414 = vmatpush1.bf16.msra.mxu0 %v357
      %415 = vmatprep.subr.bf16.mxu0 %v362
      %416 = vmatpush1.bf16.msra.mxu0 %v361
      %417 = vmatprep.subr.bf16.mxu0 %v366
      %418 = vmatpush1.bf16.msra.mxu0 %v365
      %419 = vmatprep.subr.bf16.mxu0 %v370
      %420 = vmatpush1.bf16.msra.mxu0 %v369
      %421 = vmatprep.subr.bf16.mxu0 0
      %422 = vmatpush1.bf16.msra.mxu0 0
      %423 = vmatprep.subr.bf16.mxu0 0
      %424 = vmatpush1.bf16.msra.mxu0 0
      %425 = vmatprep.subr.bf16.mxu0 0
      %426 = vmatpush1.bf16.msra.mxu0 0
      %427 = vmatprep.subr.bf16.mxu0 0
      %428 = vmatpush1.bf16.msra.mxu0 0
      %429 = vmatprep.subr.bf16.mxu0 0
      %430 = vmatpush1.bf16.msra.mxu0 0
      %431 = vmatprep.subr.bf16.mxu0 0
      %432 = vmatpush1.bf16.msra.mxu0 0
      %433 = vmatprep.subr.bf16.mxu0 0
      %434 = vmatpush1.bf16.msra.mxu0 0
      %435 = vmatprep.subr.bf16.mxu0 0
      %436 = vmatpush1.bf16.msra.mxu0 0
      %437 = vmatprep.mubr.bf16.mxu0 0
      %438 = vmatmul.mubr.bf16.gmra.mrb[0].mxu0 %v212
      %v439 = vpop.f32.mrb[0].mxu0
      %v440 = vadd.f32 0.0, %v439
      %v441 = vpop.f32.mrb[0].mxu0
      %v442 = vadd.f32 0.0, %v441
      %v443 = vpop.f32.mrb[0].mxu0
      %v444 = vpop.f32.mrb[0].mxu0
      %445 = vdwg.mxu0
      %446 = vmatprep.subr.bf16.mxu0 %v344
      %447 = vmatpush1.bf16.msra.mxu0 %v343
      %448 = vmatprep.subr.bf16.mxu0 %v348
      %449 = vmatpush1.bf16.msra.mxu0 %v347
      %450 = vmatprep.subr.bf16.mxu0 %v352
      %451 = vmatpush1.bf16.msra.mxu0 %v351
      %452 = vmatprep.subr.bf16.mxu0 %v356
      %453 = vmatpush1.bf16.msra.mxu0 %v355
      %454 = vmatprep.subr.bf16.mxu0 %v360
      %455 = vmatpush1.bf16.msra.mxu0 %v359
      %456 = vmatprep.subr.bf16.mxu0 %v364
      %457 = vmatpush1.bf16.msra.mxu0 %v363
      %458 = vmatprep.subr.bf16.mxu0 %v368
      %459 = vmatpush1.bf16.msra.mxu0 %v367
      %460 = vmatprep.subr.bf16.mxu0 %v372
      %461 = vmatpush1.bf16.msra.mxu0 %v371
      %462 = vmatprep.subr.bf16.mxu0 0
      %463 = vmatpush1.bf16.msra.mxu0 0
      %464 = vmatprep.subr.bf16.mxu0 0
      %465 = vmatpush1.bf16.msra.mxu0 0
      %466 = vmatprep.subr.bf16.mxu0 0
      %467 = vmatpush1.bf16.msra.mxu0 0
      %468 = vmatprep.subr.bf16.mxu0 0
      %469 = vmatpush1.bf16.msra.mxu0 0
      %470 = vmatprep.subr.bf16.mxu0 0
      %471 = vmatpush1.bf16.msra.mxu0 0
      %472 = vmatprep.subr.bf16.mxu0 0
      %473 = vmatpush1.bf16.msra.mxu0 0
      %474 = vmatprep.subr.bf16.mxu0 0
      %475 = vmatpush1.bf16.msra.mxu0 0
      %476 = vmatprep.subr.bf16.mxu0 0
      %477 = vmatpush1.bf16.msra.mxu0 0
      %478 = vmatprep.mubr.bf16.mxu0 0
      %479 = vmatmul.mubr.bf16.gmra.mrb[0].mxu0 %v212
      %v480 = vpop.f32.mrb[0].mxu0
      %v481 = vadd.f32 0.0, %v480
      %v482 = vpop.f32.mrb[0].mxu0
      %v483 = vadd.f32 0.0, %v482
      %v484 = vpop.f32.mrb[0].mxu0
      %v485 = vpop.f32.mrb[0].mxu0
      %486 = vdwg.mxu0
      %v487 = vadd.f32 %v208, %v440
      %v488 = vadd.f32 %v209, %v442
      %v489 = vadd.f32 %v210, %v481
      %v490 = vadd.f32 %v211, %v483
      %v491 = vxor.u32 %v487, 2147483648
      %v492 = vmul.f32 %v491, 1.442695
      %v493 = vpow.pop %v492
      %v494 = vadd.f32 %v493, 1.0
      %v495 = vrcp.pop %v494
      %v496 = vmul.f32 1.0, %v495
      %v497 = vxor.u32 %v488, 2147483648
      %v498 = vmul.f32 %v497, 1.442695
      %v499 = vpow.pop %v498
      %v500 = vadd.f32 %v499, 1.0
      %v501 = vrcp.pop %v500
      %v502 = vmul.f32 1.0, %v501
      %v503 = vtanh.pop %v489
      %v504 = vxor.u32 %v490, 2147483648
      %v505 = vmul.f32 %v504, 1.442695
      %v506 = vpow.pop %v505
      %v507 = vadd.f32 %v506, 1.0
      %v508 = vrcp.pop %v507
      %v509 = vmul.f32 1.0, %v508
      %v510 = vmul.f32 %v502, %v207
      %v511 = vmul.f32 %v496, %v503
      %v512 = vadd.f32 %v510, %v511
      %v513 = vtanh.pop %v512
      %v514 = vmul.f32 %v509, %v513
      %515 = vst [vmem:[%s197] sm:$0xff] %v514
      %s516 = scalar_lea.vmem %s191, 32
      %v517 = vld [vmem:[%s516] sm:$0xff]
      %v518 = vld [vmem:[%s516 + $0x8] sm:$0xff]
      %v519 = vld [vmem:[%s516 + $0x10] sm:$0xff]
      %v520 = vld [vmem:[%s516 + $0x18] sm:$0xff]
      %v521 = vpack.c.bf16 %v514, %v514
      %v522 = vld [vmem:[%s1] sm:$0xff]
      %v523 = vld [vmem:[%s1 + $0x8] sm:$0xff]
      %v524 = vld [vmem:[%s1 + $0x10] sm:$0xff]
      %v525 = vld [vmem:[%s1 + $0x18] sm:$0xff]
      %v526 = vld [vmem:[%s1 + $0x20] sm:$0xff]
      %v527 = vld [vmem:[%s1 + $0x28] sm:$0xff]
      %v528 = vld [vmem:[%s1 + $0x30] sm:$0xff]
      %v529 = vld [vmem:[%s1 + $0x38] sm:$0xff]
      %v530 = vld [vmem:[%s1 + $0x40] sm:$0xff]
      %v531 = vld [vmem:[%s1 + $0x48] sm:$0xff]
      %v532 = vld [vmem:[%s1 + $0x50] sm:$0xff]
      %v533 = vld [vmem:[%s1 + $0x58] sm:$0xff]
      %v534 = vld [vmem:[%s1 + $0x60] sm:$0xff]
      %v535 = vld [vmem:[%s1 + $0x68] sm:$0xff]
      %v536 = vld [vmem:[%s1 + $0x70] sm:$0xff]
      %v537 = vld [vmem:[%s1 + $0x78] sm:$0xff]
      %v538 = vld [vmem:[%s1 + $0x80] sm:$0xff]
      %v539 = vld [vmem:[%s1 + $0x88] sm:$0xff]
      %v540 = vld [vmem:[%s1 + $0x90] sm:$0xff]
      %v541 = vld [vmem:[%s1 + $0x98] sm:$0xff]
      %v542 = vld [vmem:[%s1 + $0xa0] sm:$0xff]
      %v543 = vld [vmem:[%s1 + $0xa8] sm:$0xff]
      %v544 = vld [vmem:[%s1 + $0xb0] sm:$0xff]
      %v545 = vld [vmem:[%s1 + $0xb8] sm:$0xff]
      %v546 = vld [vmem:[%s1 + $0xc0] sm:$0xff]
      %v547 = vld [vmem:[%s1 + $0xc8] sm:$0xff]
      %v548 = vld [vmem:[%s1 + $0xd0] sm:$0xff]
      %v549 = vld [vmem:[%s1 + $0xd8] sm:$0xff]
      %v550 = vld [vmem:[%s1 + $0xe0] sm:$0xff]
      %v551 = vld [vmem:[%s1 + $0xe8] sm:$0xff]
      %v552 = vld [vmem:[%s1 + $0xf0] sm:$0xff]
      %v553 = vld [vmem:[%s1 + $0xf8] sm:$0xff]
      %v586 = vunpack.c.l.b16 %v522
      %v587 = vunpack.c.h.b16 %v522
      %v588 = vunpack.c.l.b16 %v523
      %v589 = vunpack.c.h.b16 %v523
      %v590 = vunpack.c.l.b16 %v524
      %v591 = vunpack.c.h.b16 %v524
      %v592 = vunpack.c.l.b16 %v525
      %v593 = vunpack.c.h.b16 %v525
      %v594 = vunpack.c.l.b16 %v526
      %v595 = vunpack.c.h.b16 %v526
      %v596 = vunpack.c.l.b16 %v527
      %v597 = vunpack.c.h.b16 %v527
      %v598 = vunpack.c.l.b16 %v528
      %v599 = vunpack.c.h.b16 %v528
      %v600 = vunpack.c.l.b16 %v529
      %v601 = vunpack.c.h.b16 %v529
      %v602 = vunpack.c.l.b16 %v530
      %v603 = vunpack.c.h.b16 %v530
      %v604 = vunpack.c.l.b16 %v531
      %v605 = vunpack.c.h.b16 %v531
      %v606 = vunpack.c.l.b16 %v532
      %v607 = vunpack.c.h.b16 %v532
      %v608 = vunpack.c.l.b16 %v533
      %v609 = vunpack.c.h.b16 %v533
      %v610 = vunpack.c.l.b16 %v534
      %v611 = vunpack.c.h.b16 %v534
      %v612 = vunpack.c.l.b16 %v535
      %v613 = vunpack.c.h.b16 %v535
      %v614 = vunpack.c.l.b16 %v536
      %v615 = vunpack.c.h.b16 %v536
      %v616 = vunpack.c.l.b16 %v537
      %v617 = vunpack.c.h.b16 %v537
      %v618 = vunpack.c.l.b16 %v538
      %v619 = vunpack.c.h.b16 %v538
      %v620 = vunpack.c.l.b16 %v539
      %v621 = vunpack.c.h.b16 %v539
      %v622 = vunpack.c.l.b16 %v540
      %v623 = vunpack.c.h.b16 %v540
      %v624 = vunpack.c.l.b16 %v541
      %v625 = vunpack.c.h.b16 %v541
      %v626 = vunpack.c.l.b16 %v542
      %v627 = vunpack.c.h.b16 %v542
      %v628 = vunpack.c.l.b16 %v543
      %v629 = vunpack.c.h.b16 %v543
      %v630 = vunpack.c.l.b16 %v544
      %v631 = vunpack.c.h.b16 %v544
      %v632 = vunpack.c.l.b16 %v545
      %v633 = vunpack.c.h.b16 %v545
      %v634 = vunpack.c.l.b16 %v546
      %v635 = vunpack.c.h.b16 %v546
      %v636 = vunpack.c.l.b16 %v547
      %v637 = vunpack.c.h.b16 %v547
      %v638 = vunpack.c.l.b16 %v548
      %v639 = vunpack.c.h.b16 %v548
      %v640 = vunpack.c.l.b16 %v549
      %v641 = vunpack.c.h.b16 %v549
      %v642 = vunpack.c.l.b16 %v550
      %v643 = vunpack.c.h.b16 %v550
      %v644 = vunpack.c.l.b16 %v551
      %v645 = vunpack.c.h.b16 %v551
      %v646 = vunpack.c.l.b16 %v552
      %v647 = vunpack.c.h.b16 %v552
      %v648 = vunpack.c.l.b16 %v553
      %v649 = vunpack.c.h.b16 %v553
      %v650 = vpack.c.b16 %v590, %v586
      %v651 = vpack.c.b16 %v591, %v587
      %v652 = vpack.c.b16 %v592, %v588
      %v653 = vpack.c.b16 %v593, %v589
      %v654 = vpack.c.b16 %v598, %v594
      %v655 = vpack.c.b16 %v599, %v595
      %v656 = vpack.c.b16 %v600, %v596
      %v657 = vpack.c.b16 %v601, %v597
      %v658 = vpack.c.b16 %v606, %v602
      %v659 = vpack.c.b16 %v607, %v603
      %v660 = vpack.c.b16 %v608, %v604
      %v661 = vpack.c.b16 %v609, %v605
      %v662 = vpack.c.b16 %v614, %v610
      %v663 = vpack.c.b16 %v615, %v611
      %v664 = vpack.c.b16 %v616, %v612
      %v665 = vpack.c.b16 %v617, %v613
      %v666 = vpack.c.b16 %v622, %v618
      %v667 = vpack.c.b16 %v623, %v619
      %v668 = vpack.c.b16 %v624, %v620
      %v669 = vpack.c.b16 %v625, %v621
      %v670 = vpack.c.b16 %v630, %v626
      %v671 = vpack.c.b16 %v631, %v627
      %v672 = vpack.c.b16 %v632, %v628
      %v673 = vpack.c.b16 %v633, %v629
      %v674 = vpack.c.b16 %v638, %v634
      %v675 = vpack.c.b16 %v639, %v635
      %v676 = vpack.c.b16 %v640, %v636
      %v677 = vpack.c.b16 %v641, %v637
      %v678 = vpack.c.b16 %v646, %v642
      %v679 = vpack.c.b16 %v647, %v643
      %v680 = vpack.c.b16 %v648, %v644
      %v681 = vpack.c.b16 %v649, %v645
      %714 = vmatprep.subr.bf16.mxu0 %v651
      %715 = vmatpush1.bf16.msra.mxu0 %v650
      %716 = vmatprep.subr.bf16.mxu0 %v655
      %717 = vmatpush1.bf16.msra.mxu0 %v654
      %718 = vmatprep.subr.bf16.mxu0 %v659
      %719 = vmatpush1.bf16.msra.mxu0 %v658
      %720 = vmatprep.subr.bf16.mxu0 %v663
      %721 = vmatpush1.bf16.msra.mxu0 %v662
      %722 = vmatprep.subr.bf16.mxu0 %v667
      %723 = vmatpush1.bf16.msra.mxu0 %v666
      %724 = vmatprep.subr.bf16.mxu0 %v671
      %725 = vmatpush1.bf16.msra.mxu0 %v670
      %726 = vmatprep.subr.bf16.mxu0 %v675
      %727 = vmatpush1.bf16.msra.mxu0 %v674
      %728 = vmatprep.subr.bf16.mxu0 %v679
      %729 = vmatpush1.bf16.msra.mxu0 %v678
      %730 = vmatprep.subr.bf16.mxu0 0
      %731 = vmatpush1.bf16.msra.mxu0 0
      %732 = vmatprep.subr.bf16.mxu0 0
      %733 = vmatpush1.bf16.msra.mxu0 0
      %734 = vmatprep.subr.bf16.mxu0 0
      %735 = vmatpush1.bf16.msra.mxu0 0
      %736 = vmatprep.subr.bf16.mxu0 0
      %737 = vmatpush1.bf16.msra.mxu0 0
      %738 = vmatprep.subr.bf16.mxu0 0
      %739 = vmatpush1.bf16.msra.mxu0 0
      %740 = vmatprep.subr.bf16.mxu0 0
      %741 = vmatpush1.bf16.msra.mxu0 0
      %742 = vmatprep.subr.bf16.mxu0 0
      %743 = vmatpush1.bf16.msra.mxu0 0
      %744 = vmatprep.subr.bf16.mxu0 0
      %745 = vmatpush1.bf16.msra.mxu0 0
      %746 = vmatprep.mubr.bf16.mxu0 0
      %747 = vmatmul.mubr.bf16.gmra.mrb[0].mxu0 %v521
      %v748 = vpop.f32.mrb[0].mxu0
      %v749 = vadd.f32 0.0, %v748
      %v750 = vpop.f32.mrb[0].mxu0
      %v751 = vadd.f32 0.0, %v750
      %v752 = vpop.f32.mrb[0].mxu0
      %v753 = vpop.f32.mrb[0].mxu0
      %754 = vdwg.mxu0
      %755 = vmatprep.subr.bf16.mxu0 %v653
      %756 = vmatpush1.bf16.msra.mxu0 %v652
      %757 = vmatprep.subr.bf16.mxu0 %v657
      %758 = vmatpush1.bf16.msra.mxu0 %v656
      %759 = vmatprep.subr.bf16.mxu0 %v661
      %760 = vmatpush1.bf16.msra.mxu0 %v660
      %761 = vmatprep.subr.bf16.mxu0 %v665
      %762 = vmatpush1.bf16.msra.mxu0 %v664
      %763 = vmatprep.subr.bf16.mxu0 %v669
      %764 = vmatpush1.bf16.msra.mxu0 %v668
      %765 = vmatprep.subr.bf16.mxu0 %v673
      %766 = vmatpush1.bf16.msra.mxu0 %v672
      %767 = vmatprep.subr.bf16.mxu0 %v677
      %768 = vmatpush1.bf16.msra.mxu0 %v676
      %769 = vmatprep.subr.bf16.mxu0 %v681
      %770 = vmatpush1.bf16.msra.mxu0 %v680
      %771 = vmatprep.subr.bf16.mxu0 0
      %772 = vmatpush1.bf16.msra.mxu0 0
      %773 = vmatprep.subr.bf16.mxu0 0
      %774 = vmatpush1.bf16.msra.mxu0 0
      %775 = vmatprep.subr.bf16.mxu0 0
      %776 = vmatpush1.bf16.msra.mxu0 0
      %777 = vmatprep.subr.bf16.mxu0 0
      %778 = vmatpush1.bf16.msra.mxu0 0
      %779 = vmatprep.subr.bf16.mxu0 0
      %780 = vmatpush1.bf16.msra.mxu0 0
      %781 = vmatprep.subr.bf16.mxu0 0
      %782 = vmatpush1.bf16.msra.mxu0 0
      %783 = vmatprep.subr.bf16.mxu0 0
      %784 = vmatpush1.bf16.msra.mxu0 0
      %785 = vmatprep.subr.bf16.mxu0 0
      %786 = vmatpush1.bf16.msra.mxu0 0
      %787 = vmatprep.mubr.bf16.mxu0 0
      %788 = vmatmul.mubr.bf16.gmra.mrb[0].mxu0 %v521
      %v789 = vpop.f32.mrb[0].mxu0
      %v790 = vadd.f32 0.0, %v789
      %v791 = vpop.f32.mrb[0].mxu0
      %v792 = vadd.f32 0.0, %v791
      %v793 = vpop.f32.mrb[0].mxu0
      %v794 = vpop.f32.mrb[0].mxu0
      %795 = vdwg.mxu0
      %v796 = vadd.f32 %v517, %v749
      %v797 = vadd.f32 %v518, %v751
      %v798 = vadd.f32 %v519, %v790
      %v799 = vadd.f32 %v520, %v792
      %v800 = vxor.u32 %v796, 2147483648
      %v801 = vmul.f32 %v800, 1.442695
      %v802 = vpow.pop %v801
      %v803 = vadd.f32 %v802, 1.0
      %v804 = vrcp.pop %v803
      %v805 = vmul.f32 1.0, %v804
      %v806 = vxor.u32 %v797, 2147483648
      %v807 = vmul.f32 %v806, 1.442695
      %v808 = vpow.pop %v807
      %v809 = vadd.f32 %v808, 1.0
      %v810 = vrcp.pop %v809
      %v811 = vmul.f32 1.0, %v810
      %v812 = vtanh.pop %v798
      %v813 = vxor.u32 %v799, 2147483648
      %v814 = vmul.f32 %v813, 1.442695
      %v815 = vpow.pop %v814
      %v816 = vadd.f32 %v815, 1.0
      %v817 = vrcp.pop %v816
      %v818 = vmul.f32 1.0, %v817
      %v819 = vmul.f32 %v811, %v512
      %v820 = vmul.f32 %v805, %v812
      %v821 = vadd.f32 %v819, %v820
      %v822 = vtanh.pop %v821
      %v823 = vmul.f32 %v818, %v822
      %s824 = scalar_lea.vmem %s197, 8
      %825 = vst [vmem:[%s824] sm:$0xff] %v823
      %s826 = scalar_lea.vmem %s191, 64
      %v827 = vld [vmem:[%s826] sm:$0xff]
      %v828 = vld [vmem:[%s826 + $0x8] sm:$0xff]
      %v829 = vld [vmem:[%s826 + $0x10] sm:$0xff]
      %v830 = vld [vmem:[%s826 + $0x18] sm:$0xff]
      %v831 = vpack.c.bf16 %v823, %v823
      %v832 = vld [vmem:[%s1] sm:$0xff]
      %v833 = vld [vmem:[%s1 + $0x8] sm:$0xff]
      %v834 = vld [vmem:[%s1 + $0x10] sm:$0xff]
      %v835 = vld [vmem:[%s1 + $0x18] sm:$0xff]
      %v836 = vld [vmem:[%s1 + $0x20] sm:$0xff]
      %v837 = vld [vmem:[%s1 + $0x28] sm:$0xff]
      %v838 = vld [vmem:[%s1 + $0x30] sm:$0xff]
      %v839 = vld [vmem:[%s1 + $0x38] sm:$0xff]
      %v840 = vld [vmem:[%s1 + $0x40] sm:$0xff]
      %v841 = vld [vmem:[%s1 + $0x48] sm:$0xff]
      %v842 = vld [vmem:[%s1 + $0x50] sm:$0xff]
      %v843 = vld [vmem:[%s1 + $0x58] sm:$0xff]
      %v844 = vld [vmem:[%s1 + $0x60] sm:$0xff]
      %v845 = vld [vmem:[%s1 + $0x68] sm:$0xff]
      %v846 = vld [vmem:[%s1 + $0x70] sm:$0xff]
      %v847 = vld [vmem:[%s1 + $0x78] sm:$0xff]
      %v848 = vld [vmem:[%s1 + $0x80] sm:$0xff]
      %v849 = vld [vmem:[%s1 + $0x88] sm:$0xff]
      %v850 = vld [vmem:[%s1 + $0x90] sm:$0xff]
      %v851 = vld [vmem:[%s1 + $0x98] sm:$0xff]
      %v852 = vld [vmem:[%s1 + $0xa0] sm:$0xff]
      %v853 = vld [vmem:[%s1 + $0xa8] sm:$0xff]
      %v854 = vld [vmem:[%s1 + $0xb0] sm:$0xff]
      %v855 = vld [vmem:[%s1 + $0xb8] sm:$0xff]
      %v856 = vld [vmem:[%s1 + $0xc0] sm:$0xff]
      %v857 = vld [vmem:[%s1 + $0xc8] sm:$0xff]
      %v858 = vld [vmem:[%s1 + $0xd0] sm:$0xff]
      %v859 = vld [vmem:[%s1 + $0xd8] sm:$0xff]
      %v860 = vld [vmem:[%s1 + $0xe0] sm:$0xff]
      %v861 = vld [vmem:[%s1 + $0xe8] sm:$0xff]
      %v862 = vld [vmem:[%s1 + $0xf0] sm:$0xff]
      %v863 = vld [vmem:[%s1 + $0xf8] sm:$0xff]
      %v896 = vunpack.c.l.b16 %v832
      %v897 = vunpack.c.h.b16 %v832
      %v898 = vunpack.c.l.b16 %v833
      %v899 = vunpack.c.h.b16 %v833
      %v900 = vunpack.c.l.b16 %v834
      %v901 = vunpack.c.h.b16 %v834
      %v902 = vunpack.c.l.b16 %v835
      %v903 = vunpack.c.h.b16 %v835
      %v904 = vunpack.c.l.b16 %v836
      %v905 = vunpack.c.h.b16 %v836
      %v906 = vunpack.c.l.b16 %v837
      %v907 = vunpack.c.h.b16 %v837
      %v908 = vunpack.c.l.b16 %v838
      %v909 = vunpack.c.h.b16 %v838
      %v910 = vunpack.c.l.b16 %v839
      %v911 = vunpack.c.h.b16 %v839
      %v912 = vunpack.c.l.b16 %v840
      %v913 = vunpack.c.h.b16 %v840
      %v914 = vunpack.c.l.b16 %v841
      %v915 = vunpack.c.h.b16 %v841
      %v916 = vunpack.c.l.b16 %v842
      %v917 = vunpack.c.h.b16 %v842
      %v918 = vunpack.c.l.b16 %v843
      %v919 = vunpack.c.h.b16 %v843
      %v920 = vunpack.c.l.b16 %v844
      %v921 = vunpack.c.h.b16 %v844
      %v922 = vunpack.c.l.b16 %v845
      %v923 = vunpack.c.h.b16 %v845
      %v924 = vunpack.c.l.b16 %v846
      %v925 = vunpack.c.h.b16 %v846
      %v926 = vunpack.c.l.b16 %v847
      %v927 = vunpack.c.h.b16 %v847
      %v928 = vunpack.c.l.b16 %v848
      %v929 = vunpack.c.h.b16 %v848
      %v930 = vunpack.c.l.b16 %v849
      %v931 = vunpack.c.h.b16 %v849
      %v932 = vunpack.c.l.b16 %v850
      %v933 = vunpack.c.h.b16 %v850
      %v934 = vunpack.c.l.b16 %v851
      %v935 = vunpack.c.h.b16 %v851
      %v936 = vunpack.c.l.b16 %v852
      %v937 = vunpack.c.h.b16 %v852
      %v938 = vunpack.c.l.b16 %v853
      %v939 = vunpack.c.h.b16 %v853
      %v940 = vunpack.c.l.b16 %v854
      %v941 = vunpack.c.h.b16 %v854
      %v942 = vunpack.c.l.b16 %v855
      %v943 = vunpack.c.h.b16 %v855
      %v944 = vunpack.c.l.b16 %v856
      %v945 = vunpack.c.h.b16 %v856
      %v946 = vunpack.c.l.b16 %v857
      %v947 = vunpack.c.h.b16 %v857
      %v948 = vunpack.c.l.b16 %v858
      %v949 = vunpack.c.h.b16 %v858
      %v950 = vunpack.c.l.b16 %v859
      %v951 = vunpack.c.h.b16 %v859
      %v952 = vunpack.c.l.b16 %v860
      %v953 = vunpack.c.h.b16 %v860
      %v954 = vunpack.c.l.b16 %v861
      %v955 = vunpack.c.h.b16 %v861
      %v956 = vunpack.c.l.b16 %v862
      %v957 = vunpack.c.h.b16 %v862
      %v958 = vunpack.c.l.b16 %v863
      %v959 = vunpack.c.h.b16 %v863
      %v960 = vpack.c.b16 %v900, %v896
      %v961 = vpack.c.b16 %v901, %v897
      %v962 = vpack.c.b16 %v902, %v898
      %v963 = vpack.c.b16 %v903, %v899
      %v964 = vpack.c.b16 %v908, %v904
      %v965 = vpack.c.b16 %v909, %v905
      %v966 = vpack.c.b16 %v910, %v906
      %v967 = vpack.c.b16 %v911, %v907
      %v968 = vpack.c.b16 %v916, %v912
      %v969 = vpack.c.b16 %v917, %v913
      %v970 = vpack.c.b16 %v918, %v914
      %v971 = vpack.c.b16 %v919, %v915
      %v972 = vpack.c.b16 %v924, %v920
      %v973 = vpack.c.b16 %v925, %v921
      %v974 = vpack.c.b16 %v926, %v922
      %v975 = vpack.c.b16 %v927, %v923
      %v976 = vpack.c.b16 %v932, %v928
      %v977 = vpack.c.b16 %v933, %v929
      %v978 = vpack.c.b16 %v934, %v930
      %v979 = vpack.c.b16 %v935, %v931
      %v980 = vpack.c.b16 %v940, %v936
      %v981 = vpack.c.b16 %v941, %v937
      %v982 = vpack.c.b16 %v942, %v938
      %v983 = vpack.c.b16 %v943, %v939
      %v984 = vpack.c.b16 %v948, %v944
      %v985 = vpack.c.b16 %v949, %v945
      %v986 = vpack.c.b16 %v950, %v946
      %v987 = vpack.c.b16 %v951, %v947
      %v988 = vpack.c.b16 %v956, %v952
      %v989 = vpack.c.b16 %v957, %v953
      %v990 = vpack.c.b16 %v958, %v954
      %v991 = vpack.c.b16 %v959, %v955
      %1024 = vmatprep.subr.bf16.mxu0 %v961
      %1025 = vmatpush1.bf16.msra.mxu0 %v960
      %1026 = vmatprep.subr.bf16.mxu0 %v965
      %1027 = vmatpush1.bf16.msra.mxu0 %v964
      %1028 = vmatprep.subr.bf16.mxu0 %v969
      %1029 = vmatpush1.bf16.msra.mxu0 %v968
      %1030 = vmatprep.subr.bf16.mxu0 %v973
      %1031 = vmatpush1.bf16.msra.mxu0 %v972
      %1032 = vmatprep.subr.bf16.mxu0 %v977
      %1033 = vmatpush1.bf16.msra.mxu0 %v976
      %1034 = vmatprep.subr.bf16.mxu0 %v981
      %1035 = vmatpush1.bf16.msra.mxu0 %v980
      %1036 = vmatprep.subr.bf16.mxu0 %v985
      %1037 = vmatpush1.bf16.msra.mxu0 %v984
      %1038 = vmatprep.subr.bf16.mxu0 %v989
      %1039 = vmatpush1.bf16.msra.mxu0 %v988
      %1040 = vmatprep.subr.bf16.mxu0 0
      %1041 = vmatpush1.bf16.msra.mxu0 0
      %1042 = vmatprep.subr.bf16.mxu0 0
      %1043 = vmatpush1.bf16.msra.mxu0 0
      %1044 = vmatprep.subr.bf16.mxu0 0
      %1045 = vmatpush1.bf16.msra.mxu0 0
      %1046 = vmatprep.subr.bf16.mxu0 0
      %1047 = vmatpush1.bf16.msra.mxu0 0
      %1048 = vmatprep.subr.bf16.mxu0 0
      %1049 = vmatpush1.bf16.msra.mxu0 0
      %1050 = vmatprep.subr.bf16.mxu0 0
      %1051 = vmatpush1.bf16.msra.mxu0 0
      %1052 = vmatprep.subr.bf16.mxu0 0
      %1053 = vmatpush1.bf16.msra.mxu0 0
      %1054 = vmatprep.subr.bf16.mxu0 0
      %1055 = vmatpush1.bf16.msra.mxu0 0
      %1056 = vmatprep.mubr.bf16.mxu0 0
      %1057 = vmatmul.mubr.bf16.gmra.mrb[0].mxu0 %v831
      %v1058 = vpop.f32.mrb[0].mxu0
      %v1059 = vadd.f32 0.0, %v1058
      %v1060 = vpop.f32.mrb[0].mxu0
      %v1061 = vadd.f32 0.0, %v1060
      %v1062 = vpop.f32.mrb[0].mxu0
      %v1063 = vpop.f32.mrb[0].mxu0
      %1064 = vdwg.mxu0
      %1065 = vmatprep.subr.bf16.mxu0 %v963
      %1066 = vmatpush1.bf16.msra.mxu0 %v962
      %1067 = vmatprep.subr.bf16.mxu0 %v967
      %1068 = vmatpush1.bf16.msra.mxu0 %v966
      %1069 = vmatprep.subr.bf16.mxu0 %v971
      %1070 = vmatpush1.bf16.msra.mxu0 %v970
      %1071 = vmatprep.subr.bf16.mxu0 %v975
      %1072 = vmatpush1.bf16.msra.mxu0 %v974
      %1073 = vmatprep.subr.bf16.mxu0 %v979
      %1074 = vmatpush1.bf16.msra.mxu0 %v978
      %1075 = vmatprep.subr.bf16.mxu0 %v983
      %1076 = vmatpush1.bf16.msra.mxu0 %v982
      %1077 = vmatprep.subr.bf16.mxu0 %v987
      %1078 = vmatpush1.bf16.msra.mxu0 %v986
      %1079 = vmatprep.subr.bf16.mxu0 %v991
      %1080 = vmatpush1.bf16.msra.mxu0 %v990
      %1081 = vmatprep.subr.bf16.mxu0 0
      %1082 = vmatpush1.bf16.msra.mxu0 0
      %1083 = vmatprep.subr.bf16.mxu0 0
      %1084 = vmatpush1.bf16.msra.mxu0 0
      %1085 = vmatprep.subr.bf16.mxu0 0
      %1086 = vmatpush1.bf16.msra.mxu0 0
      %1087 = vmatprep.subr.bf16.mxu0 0
      %1088 = vmatpush1.bf16.msra.mxu0 0
      %1089 = vmatprep.subr.bf16.mxu0 0
      %1090 = vmatpush1.bf16.msra.mxu0 0
      %1091 = vmatprep.subr.bf16.mxu0 0
      %1092 = vmatpush1.bf16.msra.mxu0 0
      %1093 = vmatprep.subr.bf16.mxu0 0
      %1094 = vmatpush1.bf16.msra.mxu0 0
      %1095 = vmatprep.subr.bf16.mxu0 0
      %1096 = vmatpush1.bf16.msra.mxu0 0
      %1097 = vmatprep.mubr.bf16.mxu0 0
      %1098 = vmatmul.mubr.bf16.gmra.mrb[0].mxu0 %v831
      %v1099 = vpop.f32.mrb[0].mxu0
      %v1100 = vadd.f32 0.0, %v1099
      %v1101 = vpop.f32.mrb[0].mxu0
      %v1102 = vadd.f32 0.0, %v1101
      %v1103 = vpop.f32.mrb[0].mxu0
      %v1104 = vpop.f32.mrb[0].mxu0
      %1105 = vdwg.mxu0
      %v1106 = vadd.f32 %v827, %v1059
      %v1107 = vadd.f32 %v828, %v1061
      %v1108 = vadd.f32 %v829, %v1100
      %v1109 = vadd.f32 %v830, %v1102
      %v1110 = vxor.u32 %v1106, 2147483648
      %v1111 = vmul.f32 %v1110, 1.442695
      %v1112 = vpow.pop %v1111
      %v1113 = vadd.f32 %v1112, 1.0
      %v1114 = vrcp.pop %v1113
      %v1115 = vmul.f32 1.0, %v1114
      %v1116 = vxor.u32 %v1107, 2147483648
      %v1117 = vmul.f32 %v1116, 1.442695
      %v1118 = vpow.pop %v1117
      %v1119 = vadd.f32 %v1118, 1.0
      %v1120 = vrcp.pop %v1119
      %v1121 = vmul.f32 1.0, %v1120
      %v1122 = vtanh.pop %v1108
      %v1123 = vxor.u32 %v1109, 2147483648
      %v1124 = vmul.f32 %v1123, 1.442695
      %v1125 = vpow.pop %v1124
      %v1126 = vadd.f32 %v1125, 1.0
      %v1127 = vrcp.pop %v1126
      %v1128 = vmul.f32 1.0, %v1127
      %v1129 = vmul.f32 %v1121, %v821
      %v1130 = vmul.f32 %v1115, %v1122
      %v1131 = vadd.f32 %v1129, %v1130
      %v1132 = vtanh.pop %v1131
      %v1133 = vmul.f32 %v1128, %v1132
      %s1134 = scalar_lea.vmem %s197, 16
      %1135 = vst [vmem:[%s1134] sm:$0xff] %v1133
      %s1136 = scalar_lea.vmem %s191, 96
      %v1137 = vld [vmem:[%s1136] sm:$0xff]
      %v1138 = vld [vmem:[%s1136 + $0x8] sm:$0xff]
      %v1139 = vld [vmem:[%s1136 + $0x10] sm:$0xff]
      %v1140 = vld [vmem:[%s1136 + $0x18] sm:$0xff]
      %v1141 = vpack.c.bf16 %v1133, %v1133
      %v1142 = vld [vmem:[%s1] sm:$0xff]
      %v1143 = vld [vmem:[%s1 + $0x8] sm:$0xff]
      %v1144 = vld [vmem:[%s1 + $0x10] sm:$0xff]
      %v1145 = vld [vmem:[%s1 + $0x18] sm:$0xff]
      %v1146 = vld [vmem:[%s1 + $0x20] sm:$0xff]
      %v1147 = vld [vmem:[%s1 + $0x28] sm:$0xff]
      %v1148 = vld [vmem:[%s1 + $0x30] sm:$0xff]
      %v1149 = vld [vmem:[%s1 + $0x38] sm:$0xff]
      %v1150 = vld [vmem:[%s1 + $0x40] sm:$0xff]
      %v1151 = vld [vmem:[%s1 + $0x48] sm:$0xff]
      %v1152 = vld [vmem:[%s1 + $0x50] sm:$0xff]
      %v1153 = vld [vmem:[%s1 + $0x58] sm:$0xff]
      %v1154 = vld [vmem:[%s1 + $0x60] sm:$0xff]
      %v1155 = vld [vmem:[%s1 + $0x68] sm:$0xff]
      %v1156 = vld [vmem:[%s1 + $0x70] sm:$0xff]
      %v1157 = vld [vmem:[%s1 + $0x78] sm:$0xff]
      %v1158 = vld [vmem:[%s1 + $0x80] sm:$0xff]
      %v1159 = vld [vmem:[%s1 + $0x88] sm:$0xff]
      %v1160 = vld [vmem:[%s1 + $0x90] sm:$0xff]
      %v1161 = vld [vmem:[%s1 + $0x98] sm:$0xff]
      %v1162 = vld [vmem:[%s1 + $0xa0] sm:$0xff]
      %v1163 = vld [vmem:[%s1 + $0xa8] sm:$0xff]
      %v1164 = vld [vmem:[%s1 + $0xb0] sm:$0xff]
      %v1165 = vld [vmem:[%s1 + $0xb8] sm:$0xff]
      %v1166 = vld [vmem:[%s1 + $0xc0] sm:$0xff]
      %v1167 = vld [vmem:[%s1 + $0xc8] sm:$0xff]
      %v1168 = vld [vmem:[%s1 + $0xd0] sm:$0xff]
      %v1169 = vld [vmem:[%s1 + $0xd8] sm:$0xff]
      %v1170 = vld [vmem:[%s1 + $0xe0] sm:$0xff]
      %v1171 = vld [vmem:[%s1 + $0xe8] sm:$0xff]
      %v1172 = vld [vmem:[%s1 + $0xf0] sm:$0xff]
      %v1173 = vld [vmem:[%s1 + $0xf8] sm:$0xff]
      %v1206 = vunpack.c.l.b16 %v1142
      %v1207 = vunpack.c.h.b16 %v1142
      %v1208 = vunpack.c.l.b16 %v1143
      %v1209 = vunpack.c.h.b16 %v1143
      %v1210 = vunpack.c.l.b16 %v1144
      %v1211 = vunpack.c.h.b16 %v1144
      %v1212 = vunpack.c.l.b16 %v1145
      %v1213 = vunpack.c.h.b16 %v1145
      %v1214 = vunpack.c.l.b16 %v1146
      %v1215 = vunpack.c.h.b16 %v1146
      %v1216 = vunpack.c.l.b16 %v1147
      %v1217 = vunpack.c.h.b16 %v1147
      %v1218 = vunpack.c.l.b16 %v1148
      %v1219 = vunpack.c.h.b16 %v1148
      %v1220 = vunpack.c.l.b16 %v1149
      %v1221 = vunpack.c.h.b16 %v1149
      %v1222 = vunpack.c.l.b16 %v1150
      %v1223 = vunpack.c.h.b16 %v1150
      %v1224 = vunpack.c.l.b16 %v1151
      %v1225 = vunpack.c.h.b16 %v1151
      %v1226 = vunpack.c.l.b16 %v1152
      %v1227 = vunpack.c.h.b16 %v1152
      %v1228 = vunpack.c.l.b16 %v1153
      %v1229 = vunpack.c.h.b16 %v1153
      %v1230 = vunpack.c.l.b16 %v1154
      %v1231 = vunpack.c.h.b16 %v1154
      %v1232 = vunpack.c.l.b16 %v1155
      %v1233 = vunpack.c.h.b16 %v1155
      %v1234 = vunpack.c.l.b16 %v1156
      %v1235 = vunpack.c.h.b16 %v1156
      %v1236 = vunpack.c.l.b16 %v1157
      %v1237 = vunpack.c.h.b16 %v1157
      %v1238 = vunpack.c.l.b16 %v1158
      %v1239 = vunpack.c.h.b16 %v1158
      %v1240 = vunpack.c.l.b16 %v1159
      %v1241 = vunpack.c.h.b16 %v1159
      %v1242 = vunpack.c.l.b16 %v1160
      %v1243 = vunpack.c.h.b16 %v1160
      %v1244 = vunpack.c.l.b16 %v1161
      %v1245 = vunpack.c.h.b16 %v1161
      %v1246 = vunpack.c.l.b16 %v1162
      %v1247 = vunpack.c.h.b16 %v1162
      %v1248 = vunpack.c.l.b16 %v1163
      %v1249 = vunpack.c.h.b16 %v1163
      %v1250 = vunpack.c.l.b16 %v1164
      %v1251 = vunpack.c.h.b16 %v1164
      %v1252 = vunpack.c.l.b16 %v1165
      %v1253 = vunpack.c.h.b16 %v1165
      %v1254 = vunpack.c.l.b16 %v1166
      %v1255 = vunpack.c.h.b16 %v1166
      %v1256 = vunpack.c.l.b16 %v1167
      %v1257 = vunpack.c.h.b16 %v1167
      %v1258 = vunpack.c.l.b16 %v1168
      %v1259 = vunpack.c.h.b16 %v1168
      %v1260 = vunpack.c.l.b16 %v1169
      %v1261 = vunpack.c.h.b16 %v1169
      %v1262 = vunpack.c.l.b16 %v1170
      %v1263 = vunpack.c.h.b16 %v1170
      %v1264 = vunpack.c.l.b16 %v1171
      %v1265 = vunpack.c.h.b16 %v1171
      %v1266 = vunpack.c.l.b16 %v1172
      %v1267 = vunpack.c.h.b16 %v1172
      %v1268 = vunpack.c.l.b16 %v1173
      %v1269 = vunpack.c.h.b16 %v1173
      %v1270 = vpack.c.b16 %v1210, %v1206
      %v1271 = vpack.c.b16 %v1211, %v1207
      %v1272 = vpack.c.b16 %v1212, %v1208
      %v1273 = vpack.c.b16 %v1213, %v1209
      %v1274 = vpack.c.b16 %v1218, %v1214
      %v1275 = vpack.c.b16 %v1219, %v1215
      %v1276 = vpack.c.b16 %v1220, %v1216
      %v1277 = vpack.c.b16 %v1221, %v1217
      %v1278 = vpack.c.b16 %v1226, %v1222
      %v1279 = vpack.c.b16 %v1227, %v1223
      %v1280 = vpack.c.b16 %v1228, %v1224
      %v1281 = vpack.c.b16 %v1229, %v1225
      %v1282 = vpack.c.b16 %v1234, %v1230
      %v1283 = vpack.c.b16 %v1235, %v1231
      %v1284 = vpack.c.b16 %v1236, %v1232
      %v1285 = vpack.c.b16 %v1237, %v1233
      %v1286 = vpack.c.b16 %v1242, %v1238
      %v1287 = vpack.c.b16 %v1243, %v1239
      %v1288 = vpack.c.b16 %v1244, %v1240
      %v1289 = vpack.c.b16 %v1245, %v1241
      %v1290 = vpack.c.b16 %v1250, %v1246
      %v1291 = vpack.c.b16 %v1251, %v1247
      %v1292 = vpack.c.b16 %v1252, %v1248
      %v1293 = vpack.c.b16 %v1253, %v1249
      %v1294 = vpack.c.b16 %v1258, %v1254
      %v1295 = vpack.c.b16 %v1259, %v1255
      %v1296 = vpack.c.b16 %v1260, %v1256
      %v1297 = vpack.c.b16 %v1261, %v1257
      %v1298 = vpack.c.b16 %v1266, %v1262
      %v1299 = vpack.c.b16 %v1267, %v1263
      %v1300 = vpack.c.b16 %v1268, %v1264
      %v1301 = vpack.c.b16 %v1269, %v1265
      %1334 = vmatprep.subr.bf16.mxu0 %v1271
      %1335 = vmatpush1.bf16.msra.mxu0 %v1270
      %1336 = vmatprep.subr.bf16.mxu0 %v1275
      %1337 = vmatpush1.bf16.msra.mxu0 %v1274
      %1338 = vmatprep.subr.bf16.mxu0 %v1279
      %1339 = vmatpush1.bf16.msra.mxu0 %v1278
      %1340 = vmatprep.subr.bf16.mxu0 %v1283
      %1341 = vmatpush1.bf16.msra.mxu0 %v1282
      %1342 = vmatprep.subr.bf16.mxu0 %v1287
      %1343 = vmatpush1.bf16.msra.mxu0 %v1286
      %1344 = vmatprep.subr.bf16.mxu0 %v1291
      %1345 = vmatpush1.bf16.msra.mxu0 %v1290
      %1346 = vmatprep.subr.bf16.mxu0 %v1295
      %1347 = vmatpush1.bf16.msra.mxu0 %v1294
      %1348 = vmatprep.subr.bf16.mxu0 %v1299
      %1349 = vmatpush1.bf16.msra.mxu0 %v1298
      %1350 = vmatprep.subr.bf16.mxu0 0
      %1351 = vmatpush1.bf16.msra.mxu0 0
      %1352 = vmatprep.subr.bf16.mxu0 0
      %1353 = vmatpush1.bf16.msra.mxu0 0
      %1354 = vmatprep.subr.bf16.mxu0 0
      %1355 = vmatpush1.bf16.msra.mxu0 0
      %1356 = vmatprep.subr.bf16.mxu0 0
      %1357 = vmatpush1.bf16.msra.mxu0 0
      %1358 = vmatprep.subr.bf16.mxu0 0
      %1359 = vmatpush1.bf16.msra.mxu0 0
      %1360 = vmatprep.subr.bf16.mxu0 0
      %1361 = vmatpush1.bf16.msra.mxu0 0
      %1362 = vmatprep.subr.bf16.mxu0 0
      %1363 = vmatpush1.bf16.msra.mxu0 0
      %1364 = vmatprep.subr.bf16.mxu0 0
      %1365 = vmatpush1.bf16.msra.mxu0 0
      %1366 = vmatprep.mubr.bf16.mxu0 0
      %1367 = vmatmul.mubr.bf16.gmra.mrb[0].mxu0 %v1141
      %v1368 = vpop.f32.mrb[0].mxu0
      %v1369 = vadd.f32 0.0, %v1368
      %v1370 = vpop.f32.mrb[0].mxu0
      %v1371 = vadd.f32 0.0, %v1370
      %v1372 = vpop.f32.mrb[0].mxu0
      %v1373 = vpop.f32.mrb[0].mxu0
      %1374 = vdwg.mxu0
      %1375 = vmatprep.subr.bf16.mxu0 %v1273
      %1376 = vmatpush1.bf16.msra.mxu0 %v1272
      %1377 = vmatprep.subr.bf16.mxu0 %v1277
      %1378 = vmatpush1.bf16.msra.mxu0 %v1276
      %1379 = vmatprep.subr.bf16.mxu0 %v1281
      %1380 = vmatpush1.bf16.msra.mxu0 %v1280
      %1381 = vmatprep.subr.bf16.mxu0 %v1285
      %1382 = vmatpush1.bf16.msra.mxu0 %v1284
      %1383 = vmatprep.subr.bf16.mxu0 %v1289
      %1384 = vmatpush1.bf16.msra.mxu0 %v1288
      %1385 = vmatprep.subr.bf16.mxu0 %v1293
      %1386 = vmatpush1.bf16.msra.mxu0 %v1292
      %1387 = vmatprep.subr.bf16.mxu0 %v1297
      %1388 = vmatpush1.bf16.msra.mxu0 %v1296
      %1389 = vmatprep.subr.bf16.mxu0 %v1301
      %1390 = vmatpush1.bf16.msra.mxu0 %v1300
      %1391 = vmatprep.subr.bf16.mxu0 0
      %1392 = vmatpush1.bf16.msra.mxu0 0
      %1393 = vmatprep.subr.bf16.mxu0 0
      %1394 = vmatpush1.bf16.msra.mxu0 0
      %1395 = vmatprep.subr.bf16.mxu0 0
      %1396 = vmatpush1.bf16.msra.mxu0 0
      %1397 = vmatprep.subr.bf16.mxu0 0
      %1398 = vmatpush1.bf16.msra.mxu0 0
      %1399 = vmatprep.subr.bf16.mxu0 0
      %1400 = vmatpush1.bf16.msra.mxu0 0
      %1401 = vmatprep.subr.bf16.mxu0 0
      %1402 = vmatpush1.bf16.msra.mxu0 0
      %1403 = vmatprep.subr.bf16.mxu0 0
      %1404 = vmatpush1.bf16.msra.mxu0 0
      %1405 = vmatprep.subr.bf16.mxu0 0
      %1406 = vmatpush1.bf16.msra.mxu0 0
      %1407 = vmatprep.mubr.bf16.mxu0 0
      %1408 = vmatmul.mubr.bf16.gmra.mrb[0].mxu0 %v1141
      %v1409 = vpop.f32.mrb[0].mxu0
      %v1410 = vadd.f32 0.0, %v1409
      %v1411 = vpop.f32.mrb[0].mxu0
      %v1412 = vadd.f32 0.0, %v1411
      %v1413 = vpop.f32.mrb[0].mxu0
      %v1414 = vpop.f32.mrb[0].mxu0
      %1415 = vdwg.mxu0
      %v1416 = vadd.f32 %v1137, %v1369
      %v1417 = vadd.f32 %v1138, %v1371
      %v1418 = vadd.f32 %v1139, %v1410
      %v1419 = vadd.f32 %v1140, %v1412
      %v1420 = vxor.u32 %v1416, 2147483648
      %v1421 = vmul.f32 %v1420, 1.442695
      %v1422 = vpow.pop %v1421
      %v1423 = vadd.f32 %v1422, 1.0
      %v1424 = vrcp.pop %v1423
      %v1425 = vmul.f32 1.0, %v1424
      %v1426 = vxor.u32 %v1417, 2147483648
      %v1427 = vmul.f32 %v1426, 1.442695
      %v1428 = vpow.pop %v1427
      %v1429 = vadd.f32 %v1428, 1.0
      %v1430 = vrcp.pop %v1429
      %v1431 = vmul.f32 1.0, %v1430
      %v1432 = vtanh.pop %v1418
      %v1433 = vxor.u32 %v1419, 2147483648
      %v1434 = vmul.f32 %v1433, 1.442695
      %v1435 = vpow.pop %v1434
      %v1436 = vadd.f32 %v1435, 1.0
      %v1437 = vrcp.pop %v1436
      %v1438 = vmul.f32 1.0, %v1437
      %v1439 = vmul.f32 %v1431, %v1131
      %v1440 = vmul.f32 %v1425, %v1432
      %v1441 = vadd.f32 %v1439, %v1440
      %v1442 = vtanh.pop %v1441
      %v1443 = vmul.f32 %v1438, %v1442
      %s1444 = scalar_lea.vmem %s197, 24
      %1445 = vst [vmem:[%s1444] sm:$0xff] %v1443
      %1446 = vst [vmem:[#allocation2] sm:$0xff] %v1443
      %1447 = vst [vmem:[#allocation3] sm:$0xff] %v1441
      %p1448 = scmp.eq.s32.totalorder %s16, 1
      // Predicated region
      $region33: #{word_encoder_forward.1} parent=27 // pred_check
        %p1449 = pneg %p1448
      $region34: #{word_encoder_forward.1} parent=27 // pred_check_branch
        %1451 = sbr.rel (%p1449) target = $region36
      $region35: #{word_encoder_forward.1} parent=27 // pred_region
        %1452 = vst [vmem:[%s3] sm:$0xff] %v1443
        %1453 = vst [vmem:[%s4] sm:$0xff] %v1441
      $region36: #{word_encoder_forward.1} parent=27 // pred_fallthru
        _
      %s1454 = smul.u32 4, %s16
      %p1455 = scmp.lt.s32.totalorder %s1454, 7
      %s1456 = scalar_select %p1455, %s1454, 7
      %s1457 = smul.addr %s1456, 8
      %s1458 = scalar_lea.vmem %s2, %s1457
      // Predicated region
      $region37: #{word_encoder_forward.1} parent=27 // pred_check
        %p1459 = pneg %p81
      $region38: #{word_encoder_forward.1} parent=27 // pred_check_branch
        %1461 = sbr.rel (%p1459) target = $region40
      $region39: #{word_encoder_forward.1} parent=27 // pred_region
        %s1462 = smul.u32 4, %s16
      $region40: #{word_encoder_forward.1} parent=27 // pred_fallthru
        _
      // Predicated region
      $region41: #{word_encoder_forward.1} parent=27 // pred_check
        %p1463 = pneg %p102
      $region42: #{word_encoder_forward.1} parent=27 // pred_check_branch
        %1465 = sbr.rel (%p1463) target = $region44
      $region43: #{word_encoder_forward.1} parent=27 // pred_region
        _
      $region44: #{word_encoder_forward.1} parent=27 // pred_fallthru
        _
      // Predicated region
      $region45: #{word_encoder_forward.1} parent=27 // pred_check
        %p1466 = pneg %p123
      $region46: #{word_encoder_forward.1} parent=27 // pred_check_branch
        %1468 = sbr.rel (%p1466) target = $region48
      $region47: #{word_encoder_forward.1} parent=27 // pred_region
        _
      $region48: #{word_encoder_forward.1} parent=27 // pred_fallthru
        _
      // Predicated region
      $region49: #{word_encoder_forward.1} parent=27 // pred_check
        %p1469 = pneg %p102
      $region50: #{word_encoder_forward.1} parent=27 // pred_check_branch
        %1471 = sbr.rel (%p1469) target = $region52
      $region51: #{word_encoder_forward.1} parent=27 // pred_region
        _
      $region52: #{word_encoder_forward.1} parent=27 // pred_fallthru
        _
      // Predicated region
      $region53: #{word_encoder_forward.1} parent=27 // pred_check
        %p1472 = pneg %p123
      $region54: #{word_encoder_forward.1} parent=27 // pred_check_branch
        %1474 = sbr.rel (%p1472) target = $region56
      $region55: #{word_encoder_forward.1} parent=27 // pred_region
        _
      $region56: #{word_encoder_forward.1} parent=27 // pred_fallthru
        _
    $region28: #{word_encoder_forward.1} parent=5 // pred_fallthru
      _
    %p1475 = scmp.le.s32.totalorder 2, %s11
    // Predicated region
    $region57: #{word_encoder_forward.1} parent=5 // pred_check
      %p1476 = pneg %p1475
    $region58: #{word_encoder_forward.1} parent=5 // pred_check_branch
      %1478 = sbr.rel (%p1476) target = $region60
    $region59: #{word_encoder_forward.1} parent=5 // pred_region
      %s1479 = ssub.s32 %s11, 2
      // Predicated region
      $region61: #{word_encoder_forward.1} parent=59 // pred_check
        %p1480 = pneg %p87
      $region62: #{word_encoder_forward.1} parent=59 // pred_check_branch
        %1482 = sbr.rel (%p1480) target = $region64
      $region63: #{word_encoder_forward.1} parent=59 // pred_region
        %s1483 = smul.u32 4, %s17
        %p1484 = scmp.lt.s32.totalorder %s1483, 7
        %s1485 = scalar_select %p1484, %s1483, 7
        %s1486 = smul.addr %s1485, 8
        %s1487 = scalar_lea.vmem %s2, %s1486
      $region64: #{word_encoder_forward.1} parent=59 // pred_fallthru
        _
    $region60: #{word_encoder_forward.1} parent=5 // pred_fallthru
      _
  $region6: #{word_encoder_forward.1} parent=0 // loop_footer
    %s15 = sadd.s32 1, %s11
  $region7: #{word_encoder_forward.1} parent=0 // loop_footer_branch
    %10 = sbr.rel target = $region3
  $region8: #{word_encoder_forward.1} parent=0 // loop_exit
    _

</llo_original>
